<compile_context>
chip_gen: v7x
topology: tpu7x:2x2x1
jax: 0.10.0
libtpu: 0.0.40
codegen_flags: <defaults>
</compile_context>

<pallas_src>
import jax
import jax.numpy as jnp
from jax import lax
from jax.experimental import pallas as pl
from jax.experimental.pallas import tpu as pltpu


def _round_up(x, m):
    return (x + m - 1) // m * m


def _divisors_desc(n):
    return [d for d in range(n, 0, -1) if n % d == 0]


def _vmem_capacity_bytes():
    try:
        return int(pltpu.get_tpu_info().vmem_capacity_bytes)
    except Exception:
        return 64 * 1024 * 1024          # conservative (v7x per-TC VMEM)


def _halo_rows(lt):
    # conv1 is computed for Lt + 2 rows (1-row halo each side); round up to a
    # sublane multiple when Lt is aligned so reshapes stay layout-free.
    return _round_up(lt + 2, 8) if lt % 8 == 0 else lt + 2


# --------------------------------------------------------------------------
# Kernel factory: shapes / flags are static (closed over), refs positional.
# --------------------------------------------------------------------------
def _make_kernel(*, B, Lt, Lh, Cin_p, Cout_p, stride, n_l, has_projection,
                 emit_preact, compute_dtype):
    rows_h = B * Lh
    rows_o = B * Lt

    def kernel(*refs):
        it = iter(refs)
        x_ref = next(it)                                  # (B, L_buf, Cin_p)
        w1_ref = next(it)                                 # (3, Cin_p, Cout_p)
        w2_ref = next(it)                                 # (3, Cout_p, Cout_p)
        wsc_ref = next(it) if has_projection else None    # (Cin_p, Cout_p)
        b1_ref = next(it)                                 # (1, Cout_p) f32
        b2_ref = next(it)
        bsc_ref = next(it) if has_projection else None
        out_ref = next(it)                                # (B, Lt, Cout_p)
        preact_ref = next(it) if emit_preact else None
        hpad_ref = next(it)                               # (B, Lh, Cout_p) scratch

        j = pl.program_id(1)
        if n_l == 1:
            base = 0                                      # static offsets
        else:
            step = stride * Lt
            align = step & (-step)                        # pow2 divisor hint
            base = pl.multiple_of(j * step, align)

        def x_rows(start, rows):
            if stride == 1:
                sl = pl.ds(start, rows)
            else:
                sl = pl.ds(start, rows, stride=stride)    # strided sublane load
            return x_ref[:, sl, :]

        # ---- conv1 (k=3, pad=1, stride) + folded bn1 scale ------------------
        # 3 accumulating MXU matmuls over Lt + 2 halo rows (+ alignment pad).
        h = None
        for k in range(3):
            xk = x_rows(base + k, Lh).reshape(rows_h, Cin_p)
            part = jnp.dot(xk, w1_ref[k], preferred_element_type=jnp.float32)
            h = part if h is None else h + part
        h = jnp.maximum(h + b1_ref[...], 0.0)             # bn1 bias + relu

        # Stage conv1 (with halo) in VMEM; zero the rows outside [0, L_out)
        # (they are conv2's zero padding).
        hpad_ref[...] = h.astype(compute_dtype).reshape(B, Lh, Cout_p)
        zrow = jnp.zeros((B, 1, Cout_p), compute_dtype)

        @pl.when(j == 0)
        def _():
            hpad_ref[:, pl.ds(0, 1), :] = zrow

        @pl.when(j == n_l - 1)
        def _():
            hpad_ref[:, pl.ds(Lt + 1, 1), :] = zrow

        # ---- conv2 (k=3, pad=1, stride=1) + folded bn2 scale ----------------
        o = None
        for k in range(3):
            hk = hpad_ref[:, pl.ds(k, Lt), :].reshape(rows_o, Cout_p)
            part = jnp.dot(hk, w2_ref[k], preferred_element_type=jnp.float32)
            o = part if o is None else o + part
        o = o + b2_ref[...]                               # bn2 bias

        # ---- shortcut --------------------------------------------------------
        if has_projection:
            xs = x_rows(base + stride + 1, Lt).reshape(rows_o, Cin_p)
            sc = jnp.dot(xs, wsc_ref[...], preferred_element_type=jnp.float32)
            sc = sc + bsc_ref[...]
        else:
            # stride == 1 and Cin == Cout: pure identity (no matmul / BN).
            xs = x_rows(base + stride + 1, Lt).reshape(rows_o, Cout_p)
            sc = xs.astype(jnp.float32)

        preact = o + sc
        out = jnp.maximum(preact, 0.0)
        out_ref[...] = out.reshape(B, Lt, Cout_p).astype(out_ref.dtype)
        if emit_preact:
            preact_ref[...] = preact.reshape(B, Lt, Cout_p).astype(
                preact_ref.dtype)

    return kernel


# --------------------------------------------------------------------------
# Parameter preprocessing: BN folding (inference stats) into conv weights.
# --------------------------------------------------------------------------
def _fold_bn(stats, eps=1e-5):
    gamma, beta, mean, var = (jnp.asarray(t, jnp.float32) for t in stats)
    scale = gamma / jnp.sqrt(var + eps)
    bias = beta - mean * scale
    return scale, bias


def _prep_conv3(w, scale, cin_p, cout_p, cdt):
    """torch (Cout, Cin, 3) -> (3, Cin_p, Cout_p), BN scale folded per out ch."""
    cout, cin, _ = w.shape
    wt = jnp.transpose(jnp.asarray(w, jnp.float32), (2, 1, 0)) * scale[None, None, :]
    wt = jnp.pad(wt, ((0, 0), (0, cin_p - cin), (0, cout_p - cout)))
    return wt.astype(cdt)


def _prep_conv1x1(w, scale, cin_p, cout_p, cdt):
    """torch (Cout, Cin, 1) -> (Cin_p, Cout_p), BN scale folded."""
    cout, cin, _ = w.shape
    wt = jnp.transpose(jnp.asarray(w[:, :, 0], jnp.float32), (1, 0)) * scale[None, :]
    wt = jnp.pad(wt, ((0, cin_p - cin), (0, cout_p - cout)))
    return wt.astype(cdt)


def _pad_bias(b, cout_p):
    return jnp.pad(b, (0, cout_p - b.shape[0])).reshape(1, cout_p)


# --------------------------------------------------------------------------
# Wrapper: layout, padding, VMEM-aware tiling, BlockSpecs / grid.
# --------------------------------------------------------------------------
def basic_block_1d(x_ncl, params, *, stride=1, is_last=False,
                   compute_dtype=jnp.bfloat16, out_dtype=None,
                   batch_block=None, l_block=None):
    """x_ncl: (N, C_in, L) like the PyTorch Conv1d input."""
    if out_dtype is None:
        out_dtype = compute_dtype          # bf16 outputs halve HBM writeback
    N, Cin, L = x_ncl.shape
    Cout = params["w1"].shape[0]
    L_out = (L - 1) // stride + 1
    has_projection = (stride != 1) or (Cin != Cout)

    # lane-dense channel padding (multiple of 128); sliced off after the call.
    Cin_p = _round_up(Cin, 128)
    Cout_p = _round_up(Cout, 128)

    cbytes = jnp.dtype(compute_dtype).itemsize
    obytes = jnp.dtype(out_dtype).itemsize
    vmem_cap = _vmem_capacity_bytes()
    vmem_budget = int(vmem_cap * 0.55)     # tiling budget, headroom for temps

    def l_buf_of(lt):
        # zero-padded x length so every halo / strided load stays in bounds.
        return _round_up(stride * (L_out + (_halo_rows(lt) - lt) - 1) + 3, 8)

    def est_vmem(b, lt):
        lh = _halo_rows(lt)
        x_blk = 2 * b * l_buf_of(lt) * Cin_p * cbytes             # double buffered
        w_blk = 2 * cbytes * (3 * Cin_p * Cout_p + 3 * Cout_p * Cout_p
                              + (Cin_p * Cout_p if has_projection else 0))
        o_blk = 2 * b * lt * Cout_p * obytes * (2 if is_last else 1)
        hpad = b * lh * Cout_p * cbytes
        temps = 4 * b * (lh + 2 * lt) * Cout_p                    # f32 h/o/sc
        return x_blk + w_blk + o_blk + hpad + temps

    def pick_tiles(max_rows=4096):
        b_max = max(1, N // 2)     # >= 2 grid steps when N > 1 (v7x: 2 TCs)
        l_cands = [d for d in _divisors_desc(L_out) if d % 8 == 0] or [L_out]
        b_cands = [d for d in _divisors_desc(N) if d <= b_max] or [1]
        best, best_rows = (l_cands[-1], 1), -1
        for lt in l_cands:
            for b in b_cands:
                rows = b * lt
                if rows > max_rows or est_vmem(b, lt) > vmem_budget:
                    continue
                if rows > best_rows:
                    best, best_rows = (lt, b), rows
        return best

    auto_lt, auto_b = pick_tiles()
    Lt = int(l_block) if l_block is not None else auto_lt
    B = int(batch_block) if batch_block is not None else auto_b
    assert N % B == 0, "batch_block must divide N"
    assert L_out % Lt == 0, "l_block must divide L_out"
    assert Lt == L_out or Lt % 8 == 0, "l_block must be a multiple of 8 (or L_out)"
    n_l = L_out // Lt
    Lh = _halo_rows(Lt)
    L_buf = l_buf_of(Lt)

    # channels-last + zero padding; front pad of (stride + 1) rows makes the
    # m = -1 halo row and the conv padding come straight out of VMEM zeros.
    x = jnp.transpose(jnp.asarray(x_ncl, jnp.float32), (0, 2, 1))   # (N, L, Cin)
    front = stride + 1
    back = L_buf - front - L
    xbuf = jnp.pad(x, ((0, 0), (front, back), (0, Cin_p - Cin))).astype(compute_dtype)

    # BN (running stats) folded: scales into weights, biases stay f32 vectors.
    s1, b1 = _fold_bn(params["bn1"])
    s2, b2 = _fold_bn(params["bn2"])
    w1 = _prep_conv3(params["w1"], s1, Cin_p, Cout_p, compute_dtype)
    w2 = _prep_conv3(params["w2"], s2, Cout_p, Cout_p, compute_dtype)
    b1v = _pad_bias(b1, Cout_p)
    b2v = _pad_bias(b2, Cout_p)

    operands = [xbuf, w1, w2]
    in_specs = [
        pl.BlockSpec((B, L_buf, Cin_p), lambda i, j: (i, 0, 0)),
        pl.BlockSpec((3, Cin_p, Cout_p), lambda i, j: (0, 0, 0)),
        pl.BlockSpec((3, Cout_p, Cout_p), lambda i, j: (0, 0, 0)),
    ]
    bias_spec = pl.BlockSpec((1, Cout_p), lambda i, j: (0, 0))
    if has_projection:
        ssc, bsc = _fold_bn(params["bnsc"])
        wsc = _prep_conv1x1(params["wsc"], ssc, Cin_p, Cout_p, compute_dtype)
        operands.append(wsc)
        in_specs.append(pl.BlockSpec((Cin_p, Cout_p), lambda i, j: (0, 0)))
    operands += [b1v, b2v]
    in_specs += [bias_spec, bias_spec]
    if has_projection:
        operands.append(_pad_bias(bsc, Cout_p))
        in_specs.append(bias_spec)

    out_sds = jax.ShapeDtypeStruct((N, L_out, Cout_p), out_dtype)
    out_spec = pl.BlockSpec((B, Lt, Cout_p), lambda i, j: (i, j, 0))
    if is_last:
        out_shape = (out_sds, out_sds)
        out_specs = (out_spec, out_spec)
    else:
        out_shape = out_sds
        out_specs = out_spec

    kernel = _make_kernel(B=B, Lt=Lt, Lh=Lh, Cin_p=Cin_p, Cout_p=Cout_p,
                          stride=stride, n_l=n_l, has_projection=has_projection,
                          emit_preact=is_last, compute_dtype=compute_dtype)

    result = pl.pallas_call(
        kernel,
        out_shape=out_shape,
        grid=(N // B, n_l),
        in_specs=in_specs,
        out_specs=out_specs,
        scratch_shapes=[pltpu.VMEM((B, Lh, Cout_p), compute_dtype)],
        compiler_params=pltpu.CompilerParams(
            dimension_semantics=("parallel", "parallel"),
            vmem_limit_bytes=int(vmem_cap * 0.9)),
    )(*operands)

    # TODO(synk): drop these HBM round trips when stacking blocks (keep data
    #             channels-last / channel-padded between blocks).
    def to_ncl(y):
        return jnp.transpose(y[:, :, :Cout], (0, 2, 1))    # back to (N, C, L_out)

    if is_last:
        out, preact = result
        return to_ncl(out), to_ncl(preact)
    return to_ncl(result)


# --------------------------------------------------------------------------
# Pure-JAX reference (correctness check) — mirrors the PyTorch forward.
# --------------------------------------------------------------------------
def ref_basic_block_1d(x, p, *, stride=1, eps=1e-5):
    def conv1d(x, w, s, pad):
        return lax.conv_general_dilated(
            x, w, (s,), [(pad, pad)], dimension_numbers=("NCH", "OIH", "NCH"))

    def bn(x, stats):
        gamma, beta, mean, var = stats
        return ((x - mean[None, :, None]) / jnp.sqrt(var[None, :, None] + eps)
                * gamma[None, :, None] + beta[None, :, None])

    out = jax.nn.relu(bn(conv1d(x, p["w1"], stride, 1), p["bn1"]))
    out = bn(conv1d(out, p["w2"], 1, 1), p["bn2"])
    if "wsc" in p:
        sc = bn(conv1d(x, p["wsc"], stride, 0), p["bnsc"])
    else:
        sc = x
    preact = out + sc
    return jax.nn.relu(preact), preact


# --------------------------------------------------------------------------
# Deterministic parameter construction (synthetic, matches module shapes).
# --------------------------------------------------------------------------
def make_params(key, in_planes, planes, stride):
    ks = jax.random.split(key, 8)

    def bn_stats(k, c):
        k1, k2, k3, k4 = jax.random.split(k, 4)
        gamma = 1.0 + 0.1 * jax.random.normal(k1, (c,), jnp.float32)
        beta = 0.1 * jax.random.normal(k2, (c,), jnp.float32)
        mean = 0.1 * jax.random.normal(k3, (c,), jnp.float32)
        var = 1.0 + 0.1 * jnp.abs(jax.random.normal(k4, (c,), jnp.float32))
        return (gamma, beta, mean, var)

    p = {
        "w1": 0.2 * jax.random.normal(ks[0], (planes, in_planes, 3), jnp.float32),
        "w2": 0.2 * jax.random.normal(ks[1], (planes, planes, 3), jnp.float32),
        "bn1": bn_stats(ks[2], planes),
        "bn2": bn_stats(ks[3], planes),
    }
    if stride != 1 or in_planes != planes:
        p["wsc"] = 0.2 * jax.random.normal(ks[4], (planes, in_planes, 1), jnp.float32)
        p["bnsc"] = bn_stats(ks[5], planes)
    return p


if __name__ == "__main__":
    key = jax.random.PRNGKey(0)
    k_x1, k_p1, k_x2, k_p2 = jax.random.split(key, 4)

    # ---- Case 1: projection shortcut (stride=2, Cin != Cout), is_last=True ----
    N, Cin, Cout, L, stride = 2, 4, 8, 32, 2
    x = jax.random.normal(k_x1, (N, Cin, L), jnp.float32)
    params = make_params(k_p1, Cin, Cout, stride)
    ref_out, ref_preact = ref_basic_block_1d(x, params, stride=stride)

    # f32 MXU operands (tight tolerance), auto tiling.
    out, preact = basic_block_1d(x, params, stride=stride, is_last=True,
                                 compute_dtype=jnp.float32)
    out = jax.block_until_ready(out)
    preact = jax.block_until_ready(preact)
    assert out.shape == ref_out.shape and preact.shape == ref_preact.shape
    assert jnp.allclose(out, ref_out, atol=1e-3, rtol=1e-3)
    assert jnp.allclose(preact, ref_preact, atol=1e-3, rtol=1e-3)

    # Same block, forcing the L-tiled halo path (L_out=16 -> two tiles of 8).
    out_t, preact_t = basic_block_1d(x, params, stride=stride, is_last=True,
                                     compute_dtype=jnp.float32, l_block=8)
    out_t = jax.block_until_ready(out_t)
    assert jnp.allclose(out_t, ref_out, atol=1e-3, rtol=1e-3)
    assert jnp.allclose(preact_t, ref_preact, atol=1e-3, rtol=1e-3)

    # bf16 MXU operands + bf16 outputs (v6e/v7x fast path): looser tolerance.
    out_bf, preact_bf = basic_block_1d(x, params, stride=stride, is_last=True,
                                       compute_dtype=jnp.bfloat16)
    out_bf = jax.block_until_ready(out_bf)
    assert jnp.allclose(out_bf.astype(jnp.float32), ref_out, atol=1e-1, rtol=5e-2)
    assert jnp.allclose(preact_bf.astype(jnp.float32), ref_preact,
                        atol=1e-1, rtol=5e-2)

    # ---- Case 2: identity shortcut (stride=1, Cin == Cout), L-tiled -----------
    N2, C2, L2 = 2, 8, 16
    x2 = jax.random.normal(k_x2, (N2, C2, L2), jnp.float32)
    params2 = make_params(k_p2, C2, C2, 1)
    ref_out2, _ = ref_basic_block_1d(x2, params2, stride=1)
    out2 = basic_block_1d(x2, params2, stride=1, is_last=False,
                          compute_dtype=jnp.float32, l_block=8)
    out2 = jax.block_until_ready(out2)
    assert out2.shape == ref_out2.shape
    assert jnp.allclose(out2, ref_out2, atol=1e-3, rtol=1e-3)

    print("KERNEL_OK")
</pallas_src>

<mosaic_0001>
module attributes {stable_mosaic.version = 11 : i64} {
  func.func @kernel(%arg0: i32, %arg1: i32, %arg2: memref<1x56x128xf32, #tpu.memory_space<vmem>>, %arg3: memref<3x128x128xf32, #tpu.memory_space<vmem>>, %arg4: memref<3x128x128xf32, #tpu.memory_space<vmem>>, %arg5: memref<128x128xf32, #tpu.memory_space<vmem>>, %arg6: memref<1x128xf32, #tpu.memory_space<vmem>>, %arg7: memref<1x128xf32, #tpu.memory_space<vmem>>, %arg8: memref<1x128xf32, #tpu.memory_space<vmem>>, %arg9: memref<1x16x128xf32, #tpu.memory_space<vmem>>, %arg10: memref<1x16x128xf32, #tpu.memory_space<vmem>>, %arg11: memref<1x24x128xf32, #tpu.memory_space<vmem>>) attributes {dimension_semantics = [#tpu.dimension_semantics<parallel>, #tpu.dimension_semantics<parallel>], iteration_bounds = array<i64: 2, 1>, scalar_prefetch = 0 : i64, scratch_operands = 1 : i64, tpu.core_type = #tpu.core_type<tc>, window_params = [{transform_indices = @transform_0, window_bounds = array<i64: 1, 56, 128>}, {pipeline_mode = #tpu.pipeline_mode<synchronous>, transform_indices = @transform_1, window_bounds = array<i64: 3, 128, 128>}, {pipeline_mode = #tpu.pipeline_mode<synchronous>, transform_indices = @transform_2, window_bounds = array<i64: 3, 128, 128>}, {pipeline_mode = #tpu.pipeline_mode<synchronous>, transform_indices = @transform_3, window_bounds = array<i64: 128, 128>}, {pipeline_mode = #tpu.pipeline_mode<synchronous>, transform_indices = @transform_4, window_bounds = array<i64: 1, 128>}, {pipeline_mode = #tpu.pipeline_mode<synchronous>, transform_indices = @transform_5, window_bounds = array<i64: 1, 128>}, {pipeline_mode = #tpu.pipeline_mode<synchronous>, transform_indices = @transform_6, window_bounds = array<i64: 1, 128>}, {transform_indices = @transform_7, window_bounds = array<i64: 1, 16, 128>}, {transform_indices = @transform_8, window_bounds = array<i64: 1, 16, 128>}]} {
    %c0 = arith.constant 0 : index
    %c0_0 = arith.constant 0 : index
    %c0_1 = arith.constant 0 : index
    %0 = tpu.strided_load %arg2[%c0, %c0_0, %c0_1] {strides = array<i32: 1, 2, 1>} : memref<1x56x128xf32, #tpu.memory_space<vmem>>, vector<1x24x128xf32>
    %1 = vector.shape_cast %0 : vector<1x24x128xf32> to vector<24x128xf32>
    %c0_2 = arith.constant 0 : index
    %c0_3 = arith.constant 0 : index
    %c0_4 = arith.constant 0 : index
    %2 = vector.load %arg3[%c0_2, %c0_3, %c0_4] : memref<3x128x128xf32, #tpu.memory_space<vmem>>, vector<1x128x128xf32>
    %3 = vector.shape_cast %2 : vector<1x128x128xf32> to vector<128x128xf32>
    %cst = arith.constant dense<0.000000e+00> : vector<24x128xf32>
    %4 = tpu.matmul %1, %3, %cst {dimension_numbers = #tpu.dot_dimension_numbers<[1], [0], [0], [1], [0, 0, 1, 1], [], []>} : vector<24x128xf32>, vector<128x128xf32>, vector<24x128xf32> -> vector<24x128xf32>
    %c0_5 = arith.constant 0 : index
    %c1 = arith.constant 1 : index
    %c0_6 = arith.constant 0 : index
    %5 = tpu.strided_load %arg2[%c0_5, %c1, %c0_6] {strides = array<i32: 1, 2, 1>} : memref<1x56x128xf32, #tpu.memory_space<vmem>>, vector<1x24x128xf32>
    %6 = vector.shape_cast %5 : vector<1x24x128xf32> to vector<24x128xf32>
    %c1_7 = arith.constant 1 : index
    %c0_8 = arith.constant 0 : index
    %c0_9 = arith.constant 0 : index
    %7 = vector.load %arg3[%c1_7, %c0_8, %c0_9] : memref<3x128x128xf32, #tpu.memory_space<vmem>>, vector<1x128x128xf32>
    %8 = vector.shape_cast %7 : vector<1x128x128xf32> to vector<128x128xf32>
    %cst_10 = arith.constant dense<0.000000e+00> : vector<24x128xf32>
    %9 = tpu.matmul %6, %8, %cst_10 {dimension_numbers = #tpu.dot_dimension_numbers<[1], [0], [0], [1], [0, 0, 1, 1], [], []>} : vector<24x128xf32>, vector<128x128xf32>, vector<24x128xf32> -> vector<24x128xf32>
    %10 = arith.addf %4, %9 : vector<24x128xf32>
    %c0_11 = arith.constant 0 : index
    %c2 = arith.constant 2 : index
    %c0_12 = arith.constant 0 : index
    %11 = tpu.strided_load %arg2[%c0_11, %c2, %c0_12] {strides = array<i32: 1, 2, 1>} : memref<1x56x128xf32, #tpu.memory_space<vmem>>, vector<1x24x128xf32>
    %12 = vector.shape_cast %11 : vector<1x24x128xf32> to vector<24x128xf32>
    %c2_13 = arith.constant 2 : index
    %c0_14 = arith.constant 0 : index
    %c0_15 = arith.constant 0 : index
    %13 = vector.load %arg3[%c2_13, %c0_14, %c0_15] : memref<3x128x128xf32, #tpu.memory_space<vmem>>, vector<1x128x128xf32>
    %14 = vector.shape_cast %13 : vector<1x128x128xf32> to vector<128x128xf32>
    %cst_16 = arith.constant dense<0.000000e+00> : vector<24x128xf32>
    %15 = tpu.matmul %12, %14, %cst_16 {dimension_numbers = #tpu.dot_dimension_numbers<[1], [0], [0], [1], [0, 0, 1, 1], [], []>} : vector<24x128xf32>, vector<128x128xf32>, vector<24x128xf32> -> vector<24x128xf32>
    %16 = arith.addf %10, %15 : vector<24x128xf32>
    %c0_17 = arith.constant 0 : index
    %c0_18 = arith.constant 0 : index
    %17 = vector.load %arg6[%c0_17, %c0_18] : memref<1x128xf32, #tpu.memory_space<vmem>>, vector<1x128xf32>
    %18 = vector.broadcast %17 : vector<1x128xf32> to vector<24x128xf32>
    %19 = arith.addf %16, %18 : vector<24x128xf32>
    %cst_19 = arith.constant 0.000000e+00 : f32
    %20 = vector.broadcast %cst_19 : f32 to vector<24x128xf32>
    %21 = arith.maximumf %19, %20 : vector<24x128xf32>
    %22 = vector.shape_cast %21 : vector<24x128xf32> to vector<1x24x128xf32>
    %c0_20 = arith.constant 0 : index
    %c0_21 = arith.constant 0 : index
    %c0_22 = arith.constant 0 : index
    %23 = vector.load %arg11[%c0_20, %c0_21, %c0_22] : memref<1x24x128xf32, #tpu.memory_space<vmem>>, vector<1x24x128xf32>
    tpu.vector_store %arg11[%c0_20, %c0_21, %c0_22], %22 {strides = array<i32>} : memref<1x24x128xf32, #tpu.memory_space<vmem>>, vector<1x24x128xf32>,
    %cst_23 = arith.constant 0.000000e+00 : f32
    %24 = vector.broadcast %cst_23 : f32 to vector<1x1x128xf32>
    %c0_i32 = arith.constant 0 : i32
    %25 = arith.cmpi eq, %arg1, %c0_i32 : i32
    %26 = arith.extui %25 : i1 to i32
    %c0_i32_24 = arith.constant 0 : i32
    %27 = arith.cmpi ne, %26, %c0_i32_24 : i32
    scf.if %27 {
      %c0_64 = arith.constant 0 : index
      %c0_65 = arith.constant 0 : index
      %c0_66 = arith.constant 0 : index
      %65 = vector.load %arg11[%c0_64, %c0_65, %c0_66] : memref<1x24x128xf32, #tpu.memory_space<vmem>>, vector<1x1x128xf32>
      tpu.vector_store %arg11[%c0_64, %c0_65, %c0_66], %24 {strides = array<i32>} : memref<1x24x128xf32, #tpu.memory_space<vmem>>, vector<1x1x128xf32>,
    } else {
    }
    %c0_i32_25 = arith.constant 0 : i32
    %28 = arith.cmpi eq, %arg1, %c0_i32_25 : i32
    %29 = arith.extui %28 : i1 to i32
    %c0_i32_26 = arith.constant 0 : i32
    %30 = arith.cmpi ne, %29, %c0_i32_26 : i32
    scf.if %30 {
      %c0_64 = arith.constant 0 : index
      %c17 = arith.constant 17 : index
      %c0_65 = arith.constant 0 : index
      %65 = vector.load %arg11[%c0_64, %c17, %c0_65] : memref<1x24x128xf32, #tpu.memory_space<vmem>>, vector<1x1x128xf32>
      tpu.vector_store %arg11[%c0_64, %c17, %c0_65], %24 {strides = array<i32>} : memref<1x24x128xf32, #tpu.memory_space<vmem>>, vector<1x1x128xf32>,
    } else {
    }
    %c0_27 = arith.constant 0 : index
    %c0_28 = arith.constant 0 : index
    %c0_29 = arith.constant 0 : index
    %31 = vector.load %arg11[%c0_27, %c0_28, %c0_29] : memref<1x24x128xf32, #tpu.memory_space<vmem>>, vector<1x16x128xf32>
    %32 = vector.shape_cast %31 : vector<1x16x128xf32> to vector<16x128xf32>
    %c0_30 = arith.constant 0 : index
    %c0_31 = arith.constant 0 : index
    %c0_32 = arith.constant 0 : index
    %33 = vector.load %arg4[%c0_30, %c0_31, %c0_32] : memref<3x128x128xf32, #tpu.memory_space<vmem>>, vector<1x128x128xf32>
    %34 = vector.shape_cast %33 : vector<1x128x128xf32> to vector<128x128xf32>
    %cst_33 = arith.constant dense<0.000000e+00> : vector<16x128xf32>
    %35 = tpu.matmul %32, %34, %cst_33 {dimension_numbers = #tpu.dot_dimension_numbers<[1], [0], [0], [1], [0, 0, 1, 1], [], []>} : vector<16x128xf32>, vector<128x128xf32>, vector<16x128xf32> -> vector<16x128xf32>
    %c0_34 = arith.constant 0 : index
    %c1_35 = arith.constant 1 : index
    %c0_36 = arith.constant 0 : index
    %36 = vector.load %arg11[%c0_34, %c1_35, %c0_36] : memref<1x24x128xf32, #tpu.memory_space<vmem>>, vector<1x16x128xf32>
    %37 = vector.shape_cast %36 : vector<1x16x128xf32> to vector<16x128xf32>
    %c1_37 = arith.constant 1 : index
    %c0_38 = arith.constant 0 : index
    %c0_39 = arith.constant 0 : index
    %38 = vector.load %arg4[%c1_37, %c0_38, %c0_39] : memref<3x128x128xf32, #tpu.memory_space<vmem>>, vector<1x128x128xf32>
    %39 = vector.shape_cast %38 : vector<1x128x128xf32> to vector<128x128xf32>
    %cst_40 = arith.constant dense<0.000000e+00> : vector<16x128xf32>
    %40 = tpu.matmul %37, %39, %cst_40 {dimension_numbers = #tpu.dot_dimension_numbers<[1], [0], [0], [1], [0, 0, 1, 1], [], []>} : vector<16x128xf32>, vector<128x128xf32>, vector<16x128xf32> -> vector<16x128xf32>
    %41 = arith.addf %35, %40 : vector<16x128xf32>
    %c0_41 = arith.constant 0 : index
    %c2_42 = arith.constant 2 : index
    %c0_43 = arith.constant 0 : index
    %42 = vector.load %arg11[%c0_41, %c2_42, %c0_43] : memref<1x24x128xf32, #tpu.memory_space<vmem>>, vector<1x16x128xf32>
    %43 = vector.shape_cast %42 : vector<1x16x128xf32> to vector<16x128xf32>
    %c2_44 = arith.constant 2 : index
    %c0_45 = arith.constant 0 : index
    %c0_46 = arith.constant 0 : index
    %44 = vector.load %arg4[%c2_44, %c0_45, %c0_46] : memref<3x128x128xf32, #tpu.memory_space<vmem>>, vector<1x128x128xf32>
    %45 = vector.shape_cast %44 : vector<1x128x128xf32> to vector<128x128xf32>
    %cst_47 = arith.constant dense<0.000000e+00> : vector<16x128xf32>
    %46 = tpu.matmul %43, %45, %cst_47 {dimension_numbers = #tpu.dot_dimension_numbers<[1], [0], [0], [1], [0, 0, 1, 1], [], []>} : vector<16x128xf32>, vector<128x128xf32>, vector<16x128xf32> -> vector<16x128xf32>
    %47 = arith.addf %41, %46 : vector<16x128xf32>
    %c0_48 = arith.constant 0 : index
    %c0_49 = arith.constant 0 : index
    %48 = vector.load %arg7[%c0_48, %c0_49] : memref<1x128xf32, #tpu.memory_space<vmem>>, vector<1x128xf32>
    %49 = vector.broadcast %48 : vector<1x128xf32> to vector<16x128xf32>
    %50 = arith.addf %47, %49 : vector<16x128xf32>
    %c0_50 = arith.constant 0 : index
    %c3 = arith.constant 3 : index
    %c0_51 = arith.constant 0 : index
    %51 = tpu.strided_load %arg2[%c0_50, %c3, %c0_51] {strides = array<i32: 1, 2, 1>} : memref<1x56x128xf32, #tpu.memory_space<vmem>>, vector<1x16x128xf32>
    %52 = vector.shape_cast %51 : vector<1x16x128xf32> to vector<16x128xf32>
    %c0_52 = arith.constant 0 : index
    %c0_53 = arith.constant 0 : index
    %53 = vector.load %arg5[%c0_52, %c0_53] : memref<128x128xf32, #tpu.memory_space<vmem>>, vector<128x128xf32>
    %cst_54 = arith.constant dense<0.000000e+00> : vector<16x128xf32>
    %54 = tpu.matmul %52, %53, %cst_54 {dimension_numbers = #tpu.dot_dimension_numbers<[1], [0], [0], [1], [0, 0, 1, 1], [], []>} : vector<16x128xf32>, vector<128x128xf32>, vector<16x128xf32> -> vector<16x128xf32>
    %c0_55 = arith.constant 0 : index
    %c0_56 = arith.constant 0 : index
    %55 = vector.load %arg8[%c0_55, %c0_56] : memref<1x128xf32, #tpu.memory_space<vmem>>, vector<1x128xf32>
    %56 = vector.broadcast %55 : vector<1x128xf32> to vector<16x128xf32>
    %57 = arith.addf %54, %56 : vector<16x128xf32>
    %58 = arith.addf %50, %57 : vector<16x128xf32>
    %cst_57 = arith.constant 0.000000e+00 : f32
    %59 = vector.broadcast %cst_57 : f32 to vector<16x128xf32>
    %60 = arith.maximumf %58, %59 : vector<16x128xf32>
    %61 = vector.shape_cast %60 : vector<16x128xf32> to vector<1x16x128xf32>
    %c0_58 = arith.constant 0 : index
    %c0_59 = arith.constant 0 : index
    %c0_60 = arith.constant 0 : index
    %62 = vector.load %arg9[%c0_58, %c0_59, %c0_60] : memref<1x16x128xf32, #tpu.memory_space<vmem>>, vector<1x16x128xf32>
    tpu.vector_store %arg9[%c0_58, %c0_59, %c0_60], %61 {strides = array<i32>} : memref<1x16x128xf32, #tpu.memory_space<vmem>>, vector<1x16x128xf32>,
    %63 = vector.shape_cast %58 : vector<16x128xf32> to vector<1x16x128xf32>
    %c0_61 = arith.constant 0 : index
    %c0_62 = arith.constant 0 : index
    %c0_63 = arith.constant 0 : index
    %64 = vector.load %arg10[%c0_61, %c0_62, %c0_63] : memref<1x16x128xf32, #tpu.memory_space<vmem>>, vector<1x16x128xf32>
    tpu.vector_store %arg10[%c0_61, %c0_62, %c0_63], %63 {strides = array<i32>} : memref<1x16x128xf32, #tpu.memory_space<vmem>>, vector<1x16x128xf32>,
    return
  }
  func.func @transform_0(%arg0: i32, %arg1: i32) -> (i32, i32, i32) {
    %c0_i32 = arith.constant 0 : i32
    %c0_i32_0 = arith.constant 0 : i32
    %c0_i32_1 = arith.constant 0 : i32
    return %arg0, %c0_i32, %c0_i32_0 : i32, i32, i32
  }
  func.func @transform_1(%arg0: i32, %arg1: i32) -> (i32, i32, i32) {
    %c0_i32 = arith.constant 0 : i32
    %c0_i32_0 = arith.constant 0 : i32
    %c0_i32_1 = arith.constant 0 : i32
    %c0_i32_2 = arith.constant 0 : i32
    return %c0_i32, %c0_i32_0, %c0_i32_1 : i32, i32, i32
  }
  func.func @transform_2(%arg0: i32, %arg1: i32) -> (i32, i32, i32) {
    %c0_i32 = arith.constant 0 : i32
    %c0_i32_0 = arith.constant 0 : i32
    %c0_i32_1 = arith.constant 0 : i32
    %c0_i32_2 = arith.constant 0 : i32
    return %c0_i32, %c0_i32_0, %c0_i32_1 : i32, i32, i32
  }
  func.func @transform_3(%arg0: i32, %arg1: i32) -> (i32, i32) {
    %c0_i32 = arith.constant 0 : i32
    %c0_i32_0 = arith.constant 0 : i32
    %c0_i32_1 = arith.constant 0 : i32
    return %c0_i32, %c0_i32_0 : i32, i32
  }
  func.func @transform_4(%arg0: i32, %arg1: i32) -> (i32, i32) {
    %c0_i32 = arith.constant 0 : i32
    %c0_i32_0 = arith.constant 0 : i32
    %c0_i32_1 = arith.constant 0 : i32
    return %c0_i32, %c0_i32_0 : i32, i32
  }
  func.func @transform_5(%arg0: i32, %arg1: i32) -> (i32, i32) {
    %c0_i32 = arith.constant 0 : i32
    %c0_i32_0 = arith.constant 0 : i32
    %c0_i32_1 = arith.constant 0 : i32
    return %c0_i32, %c0_i32_0 : i32, i32
  }
  func.func @transform_6(%arg0: i32, %arg1: i32) -> (i32, i32) {
    %c0_i32 = arith.constant 0 : i32
    %c0_i32_0 = arith.constant 0 : i32
    %c0_i32_1 = arith.constant 0 : i32
    return %c0_i32, %c0_i32_0 : i32, i32
  }
  func.func @transform_7(%arg0: i32, %arg1: i32) -> (i32, i32, i32) {
    %c0_i32 = arith.constant 0 : i32
    %c0_i32_0 = arith.constant 0 : i32
    return %arg0, %arg1, %c0_i32 : i32, i32, i32
  }
  func.func @transform_8(%arg0: i32, %arg1: i32) -> (i32, i32, i32) {
    %c0_i32 = arith.constant 0 : i32
    %c0_i32_0 = arith.constant 0 : i32
    return %arg0, %arg1, %c0_i32 : i32, i32, i32
  }
}

</mosaic_0001>

<llo_original>
// kernel: tpu_custom_call.1
$region0: #{tpu_custom_call.1}
  #allocation0 [shape = 'u32[]', space=smem, size = 0x4, offset = 0x4, fixed_abs, tag = 'smem constant byte address 0x4 - core index']
  #allocation1 [shape = 'u32[144,128]{1,0:T(1,128)}', space=vmem, size = 0x12000, scoped, tag = 'internal scratch']
  #allocation2 [shape = 'f32[1,24,128]{2,1,0:T(8,128)}', space=vmem, size = 0x3000, scoped, tag = 'scratch operand']
  %s0 = inlined_call_operand.hbm [shape: f32[2,56,128], index: 0, kind: input, shape index: {}]
  %s1 = inlined_call_operand.hbm [shape: f32[3,128,128], index: 1, kind: input, shape index: {}]
  %s2 = inlined_call_operand.hbm [shape: f32[3,128,128], index: 2, kind: input, shape index: {}]
  %s3 = inlined_call_operand.hbm [shape: f32[128,128], index: 3, kind: input, shape index: {}]
  %s4 = inlined_call_operand.vmem [shape: f32[1,128], index: 4, kind: input, shape index: {}]
  %s5 = inlined_call_operand.vmem [shape: f32[1,128], index: 5, kind: input, shape index: {}]
  %s6 = inlined_call_operand.vmem [shape: f32[1,128], index: 6, kind: input, shape index: {}]
  %s7 = inlined_call_operand.hbm [shape: f32[2,16,128], index: 7, kind: output, shape index: {0}]
  %s8 = inlined_call_operand.hbm [shape: f32[2,16,128], index: 8, kind: output, shape index: {1}]
  %9 = xla_tuple %s7, %s8
  %s10 = sld [smem:[#allocation0]]
  $region89: #{tpu_custom_call.1} parent=0
    _
  %s12 = ssub.s32 1, %s10
  %s13 = scalar_select 0, %s12, %s10
  $region1: #{tpu_custom_call.1} parent=0
    #allocation3 [shape = 'u8[57344]{0}', space=vmem, size = 0xe000, scoped, tag = 'input window, operand 0']
    #allocation4 [shape = 's32[2]{0}', space=sflag, size = 0x8, scoped, tag = 'scoped memory for tpu_custom_call.1']
    #allocation5 [shape = 's32[2]{0}', space=sflag, size = 0x8, scoped, tag = 'scoped memory for tpu_custom_call.1']
    #allocation6 [shape = 'u8[196608]{0}', space=vmem, size = 0x30000, scoped, tag = 'input window, operand 1, single buffered']
    #allocation7 [shape = 's32[1]{0}', space=sflag, size = 0x4, scoped, tag = 'scoped memory for tpu_custom_call.1']
    #allocation8 [shape = 'u8[196608]{0}', space=vmem, size = 0x30000, scoped, tag = 'input window, operand 2, single buffered']
    #allocation9 [shape = 'u8[65536]{0}', space=vmem, size = 0x10000, scoped, tag = 'input window, operand 3, single buffered']
    #allocation10 [shape = 's32[1]{0}', space=sflag, size = 0x4, scoped, tag = 'scoped memory for tpu_custom_call.1']
    #allocation11 [shape = 'u8[16384]{0}', space=vmem, size = 0x4000, scoped, tag = 'output window, operand 0']
    #allocation12 [shape = 'u8[16384]{0}', space=vmem, size = 0x4000, scoped, tag = 'output window, operand 1']
    #allocation13 [shape = 's32[2]{0}', space=sflag, size = 0x8, scoped, tag = 'scoped memory for tpu_custom_call.1']
    %14 = vsyncpa [#allocation4], 0
    %s15 = scalar_lea.sflag [#allocation4], 1
    %16 = vsyncpa %s15, 0
    %17 = vsyncpa [#allocation7], 0
    %18 = vsyncpa [#allocation10], 0
    %19 = vsyncpa [#allocation5], 0
    %s20 = scalar_lea.sflag [#allocation5], 1
    %21 = vsyncpa %s20, 0
    %22 = vsyncpa [#allocation13], 0
    %s23 = scalar_lea.sflag [#allocation13], 1
    %24 = vsyncpa %s23, 0
    loop: start=0, step=1, limit=4
    $region2: #{tpu_custom_call.1} parent=1 // loop_pre_header
      _
    $region3: #{tpu_custom_call.1} parent=1 // loop_header
      %s26 = sphi 0, %s30
      %p27 = scmp.ge.s32.totalorder %s26, 4
      %s33 = sphi 0, %s45
      %s34 = sphi 0, %s41
      %s35 = sphi 0, %s33
      %s36 = sphi 0, %s34
      %s37 = sphi 0, %s35
      %s38 = sphi 0, %s36
      %s48 = sphi 0, %s50
      %s51 = sphi 0, %s48
      %s52 = sphi 0, %s51
      %s68 = sphi 0, %s52
      %s72 = sphi 0, %s72
      %s74 = sphi 0, %s72
      %s75 = sphi 0, %s74
      %s89 = sphi 0, %s75
      %s93 = sphi 0, %s93
      %s95 = sphi 0, %s93
      %s96 = sphi 0, %s95
      %s110 = sphi 0, %s96
      %s114 = sphi 0, %s114
      %s116 = sphi 0, %s114
      %s117 = sphi 0, %s116
      %s131 = sphi 0, %s117
      %s135 = sphi 0, %s135
      %s137 = sphi 0, %s135
      %s138 = sphi 0, %s137
      %s152 = sphi 0, %s138
      %s156 = sphi 0, %s156
      %s158 = sphi 0, %s156
      %s159 = sphi 0, %s158
      %s173 = sphi 0, %s159
      %s177 = sphi 0, %s177
      %s179 = sphi 0, %s177
      %s180 = sphi 0, %s179
      %s194 = sphi 0, %s180
      %s202 = sphi 0, %s204
      %s205 = sphi 0, %s202
      %s206 = sphi 0, %s205
      %s222 = sphi 0, %s206
      %s230 = sphi 0, %s232
      %s233 = sphi 0, %s230
      %s234 = sphi 0, %s233
      %s250 = sphi 0, %s234
    $region4: #{tpu_custom_call.1} parent=1 // loop_header_branch
      %29 = sbr.rel (%p27) target = $region8
    $region5: #{tpu_custom_call.1} parent=1 // loop_body
      %s31 = ssub.s32 %s26, 1
      %s32 = ssub.s32 %s26, 2
      %s39 = sadd.s32 1, %s34
      %p40 = scmp.ge.s32.totalorder %s39, 1
      %s41 = scalar_select %p40, 0, %s39
      %s42 = sadd.s32 1, %s33
      %s43 = scalar_select %p40, %s42, %s33
      %p44 = scmp.ge.s32.totalorder %s43, 2
      %s45 = scalar_select %p44, 0, %s43
      %s46 = ssub.s32 %s33, %s45
      %p47 = scmp.eq.s32.totalorder %s46, 0
      %s49 = sadd.s32 %s48, 1
      %s50 = scalar_select %p47, %s48, %s49
      %p53 = pneg %p47
      %p54 = scmp.eq.s32.totalorder %s26, 1
      %p55 = por %p53, %p54
      %p56 = scmp.ne.s32.totalorder %s48, %s51
      %p57 = scmp.eq.s32.totalorder %s26, 0
      %p58 = por %p56, %p57
      %p59 = scmp.ne.s32.totalorder %s48, %s51
      %p60 = scmp.eq.s32.totalorder %s31, 1
      %p61 = por %p59, %p60
      %p62 = scmp.ne.s32.totalorder %s51, %s52
      %p63 = scmp.eq.s32.totalorder %s31, 0
      %p64 = por %p62, %p63
      %p65 = scmp.ne.s32.totalorder %s51, %s52
      %p66 = scmp.eq.s32.totalorder %s32, 1
      %p67 = por %p65, %p66
      %p69 = scmp.ne.s32.totalorder %s52, %s68
      %p70 = scmp.eq.s32.totalorder %s32, 0
      %p71 = por %p69, %p70
      %s73 = sadd.s32 %s72, 1
      %p76 = scmp.eq.s32.totalorder %s26, 1
      %p77 = scmp.ne.s32.totalorder %s72, %s74
      %p78 = scmp.eq.s32.totalorder %s26, 0
      %p79 = por %p77, %p78
      %p80 = scmp.ne.s32.totalorder %s72, %s74
      %p81 = scmp.eq.s32.totalorder %s31, 1
      %p82 = por %p80, %p81
      %p83 = scmp.ne.s32.totalorder %s74, %s75
      %p84 = scmp.eq.s32.totalorder %s31, 0
      %p85 = por %p83, %p84
      %p86 = scmp.ne.s32.totalorder %s74, %s75
      %p87 = scmp.eq.s32.totalorder %s32, 1
      %p88 = por %p86, %p87
      %p90 = scmp.ne.s32.totalorder %s75, %s89
      %p91 = scmp.eq.s32.totalorder %s32, 0
      %p92 = por %p90, %p91
      %s94 = sadd.s32 %s93, 1
      %p97 = scmp.eq.s32.totalorder %s26, 1
      %p98 = scmp.ne.s32.totalorder %s93, %s95
      %p99 = scmp.eq.s32.totalorder %s26, 0
      %p100 = por %p98, %p99
      %p101 = scmp.ne.s32.totalorder %s93, %s95
      %p102 = scmp.eq.s32.totalorder %s31, 1
      %p103 = por %p101, %p102
      %p104 = scmp.ne.s32.totalorder %s95, %s96
      %p105 = scmp.eq.s32.totalorder %s31, 0
      %p106 = por %p104, %p105
      %p107 = scmp.ne.s32.totalorder %s95, %s96
      %p108 = scmp.eq.s32.totalorder %s32, 1
      %p109 = por %p107, %p108
      %p111 = scmp.ne.s32.totalorder %s96, %s110
      %p112 = scmp.eq.s32.totalorder %s32, 0
      %p113 = por %p111, %p112
      %s115 = sadd.s32 %s114, 1
      %p118 = scmp.eq.s32.totalorder %s26, 1
      %p119 = scmp.ne.s32.totalorder %s114, %s116
      %p120 = scmp.eq.s32.totalorder %s26, 0
      %p121 = por %p119, %p120
      %p122 = scmp.ne.s32.totalorder %s114, %s116
      %p123 = scmp.eq.s32.totalorder %s31, 1
      %p124 = por %p122, %p123
      %p125 = scmp.ne.s32.totalorder %s116, %s117
      %p126 = scmp.eq.s32.totalorder %s31, 0
      %p127 = por %p125, %p126
      %p128 = scmp.ne.s32.totalorder %s116, %s117
      %p129 = scmp.eq.s32.totalorder %s32, 1
      %p130 = por %p128, %p129
      %p132 = scmp.ne.s32.totalorder %s117, %s131
      %p133 = scmp.eq.s32.totalorder %s32, 0
      %p134 = por %p132, %p133
      %s136 = sadd.s32 %s135, 1
      %p139 = scmp.eq.s32.totalorder %s26, 1
      %p140 = scmp.ne.s32.totalorder %s135, %s137
      %p141 = scmp.eq.s32.totalorder %s26, 0
      %p142 = por %p140, %p141
      %p143 = scmp.ne.s32.totalorder %s135, %s137
      %p144 = scmp.eq.s32.totalorder %s31, 1
      %p145 = por %p143, %p144
      %p146 = scmp.ne.s32.totalorder %s137, %s138
      %p147 = scmp.eq.s32.totalorder %s31, 0
      %p148 = por %p146, %p147
      %p149 = scmp.ne.s32.totalorder %s137, %s138
      %p150 = scmp.eq.s32.totalorder %s32, 1
      %p151 = por %p149, %p150
      %p153 = scmp.ne.s32.totalorder %s138, %s152
      %p154 = scmp.eq.s32.totalorder %s32, 0
      %p155 = por %p153, %p154
      %s157 = sadd.s32 %s156, 1
      %p160 = scmp.eq.s32.totalorder %s26, 1
      %p161 = scmp.ne.s32.totalorder %s156, %s158
      %p162 = scmp.eq.s32.totalorder %s26, 0
      %p163 = por %p161, %p162
      %p164 = scmp.ne.s32.totalorder %s156, %s158
      %p165 = scmp.eq.s32.totalorder %s31, 1
      %p166 = por %p164, %p165
      %p167 = scmp.ne.s32.totalorder %s158, %s159
      %p168 = scmp.eq.s32.totalorder %s31, 0
      %p169 = por %p167, %p168
      %p170 = scmp.ne.s32.totalorder %s158, %s159
      %p171 = scmp.eq.s32.totalorder %s32, 1
      %p172 = por %p170, %p171
      %p174 = scmp.ne.s32.totalorder %s159, %s173
      %p175 = scmp.eq.s32.totalorder %s32, 0
      %p176 = por %p174, %p175
      %s178 = sadd.s32 %s177, 1
      %p181 = scmp.eq.s32.totalorder %s26, 1
      %p182 = scmp.ne.s32.totalorder %s177, %s179
      %p183 = scmp.eq.s32.totalorder %s26, 0
      %p184 = por %p182, %p183
      %p185 = scmp.ne.s32.totalorder %s177, %s179
      %p186 = scmp.eq.s32.totalorder %s31, 1
      %p187 = por %p185, %p186
      %p188 = scmp.ne.s32.totalorder %s179, %s180
      %p189 = scmp.eq.s32.totalorder %s31, 0
      %p190 = por %p188, %p189
      %p191 = scmp.ne.s32.totalorder %s179, %s180
      %p192 = scmp.eq.s32.totalorder %s32, 1
      %p193 = por %p191, %p192
      %p195 = scmp.ne.s32.totalorder %s180, %s194
      %p196 = scmp.eq.s32.totalorder %s32, 0
      %p197 = por %p195, %p196
      %s198 = ssub.s32 %s33, %s45
      %s199 = ssub.s32 %s34, %s41
      %s200 = sor.u32 %s198, %s199
      %p201 = scmp.eq.s32.totalorder %s200, 0
      %s203 = sadd.s32 %s202, 1
      %s204 = scalar_select %p201, %s202, %s203
      %p207 = pneg %p201
      %p208 = scmp.eq.s32.totalorder %s26, 1
      %p209 = por %p207, %p208
      %p210 = scmp.ne.s32.totalorder %s202, %s205
      %p211 = scmp.eq.s32.totalorder %s26, 0
      %p212 = por %p210, %p211
      %p213 = scmp.ne.s32.totalorder %s202, %s205
      %p214 = scmp.eq.s32.totalorder %s31, 1
      %p215 = por %p213, %p214
      %p216 = scmp.ne.s32.totalorder %s205, %s206
      %p217 = scmp.eq.s32.totalorder %s31, 0
      %p218 = por %p216, %p217
      %p219 = scmp.ne.s32.totalorder %s205, %s206
      %p220 = scmp.eq.s32.totalorder %s32, 1
      %p221 = por %p219, %p220
      %p223 = scmp.ne.s32.totalorder %s206, %s222
      %p224 = scmp.eq.s32.totalorder %s32, 0
      %p225 = por %p223, %p224
      %s226 = ssub.s32 %s33, %s45
      %s227 = ssub.s32 %s34, %s41
      %s228 = sor.u32 %s226, %s227
      %p229 = scmp.eq.s32.totalorder %s228, 0
      %s231 = sadd.s32 %s230, 1
      %s232 = scalar_select %p229, %s230, %s231
      %p235 = pneg %p229
      %p236 = scmp.eq.s32.totalorder %s26, 1
      %p237 = por %p235, %p236
      %p238 = scmp.ne.s32.totalorder %s230, %s233
      %p239 = scmp.eq.s32.totalorder %s26, 0
      %p240 = por %p238, %p239
      %p241 = scmp.ne.s32.totalorder %s230, %s233
      %p242 = scmp.eq.s32.totalorder %s31, 1
      %p243 = por %p241, %p242
      %p244 = scmp.ne.s32.totalorder %s233, %s234
      %p245 = scmp.eq.s32.totalorder %s31, 0
      %p246 = por %p244, %p245
      %p247 = scmp.ne.s32.totalorder %s233, %s234
      %p248 = scmp.eq.s32.totalorder %s32, 1
      %p249 = por %p247, %p248
      %p251 = scmp.ne.s32.totalorder %s234, %s250
      %p252 = scmp.eq.s32.totalorder %s32, 0
      %p253 = por %p251, %p252
      %p254 = scmp.le.s32.totalorder 1, %s26
      %p255 = scmp.lt.s32.totalorder %s26, 3
      %p256 = pnand %p254, %p255
      %p257 = pneg %p256
      // Predicated region
      $region9: #{tpu_custom_call.1} parent=5 // pred_check
        _
      $region10: #{tpu_custom_call.1} parent=5 // pred_check_branch
        %259 = sbr.rel (%p256) target = $region12
      $region11: #{tpu_custom_call.1} parent=5 // pred_region
        %s260 = ssub.s32 %s26, 1
        // Predicated region
        $region13: #{tpu_custom_call.1} parent=11 // pred_check
          %p261 = pneg %p85
        $region14: #{tpu_custom_call.1} parent=11 // pred_check_branch
          %263 = sbr.rel (%p261) target = $region16
        $region15: #{tpu_custom_call.1} parent=11 // pred_region
          %s265 = ssub.s32 6144, 6144
          %266 = vsyncadd [#allocation7], %s265
          %s267 = sshll.u32 [#allocation6], 4
          %s268 = int_to_ptr.vmem [resolvable:$true] %s267
          %273 = dma.hbm_to_vmem [thread:$0]  %s1, 6144, %s268, [#allocation7], 128, 128, 8
        $region16: #{tpu_custom_call.1} parent=11 // pred_fallthru
          _
        // Predicated region
        $region17: #{tpu_custom_call.1} parent=11 // pred_check
          %p274 = pneg %p106
        $region18: #{tpu_custom_call.1} parent=11 // pred_check_branch
          %276 = sbr.rel (%p274) target = $region20
        $region19: #{tpu_custom_call.1} parent=11 // pred_region
          %s278 = ssub.s32 6144, 6144
          %279 = vsyncadd [#allocation7], %s278
          %s280 = sshll.u32 [#allocation8], 4
          %s281 = int_to_ptr.vmem [resolvable:$true] %s280
          %286 = dma.hbm_to_vmem [thread:$0]  %s2, 6144, %s281, [#allocation7], 128, 128, 8
        $region20: #{tpu_custom_call.1} parent=11 // pred_fallthru
          _
        // Predicated region
        $region21: #{tpu_custom_call.1} parent=11 // pred_check
          %p287 = pneg %p127
        $region22: #{tpu_custom_call.1} parent=11 // pred_check_branch
          %289 = sbr.rel (%p287) target = $region24
        $region23: #{tpu_custom_call.1} parent=11 // pred_region
          %s291 = ssub.s32 2048, 2048
          %292 = vsyncadd [#allocation10], %s291
          %s293 = sshll.u32 [#allocation9], 4
          %s294 = int_to_ptr.vmem [resolvable:$true] %s293
          %299 = dma.hbm_to_vmem [thread:$0]  %s3, 2048, %s294, [#allocation10], 128, 128, 8
        $region24: #{tpu_custom_call.1} parent=11 // pred_fallthru
          _
        // Predicated region
        $region25: #{tpu_custom_call.1} parent=11 // pred_check
          %p300 = pneg %p148
        $region26: #{tpu_custom_call.1} parent=11 // pred_check_branch
          %302 = sbr.rel (%p300) target = $region28
        $region27: #{tpu_custom_call.1} parent=11 // pred_region
          _
        $region28: #{tpu_custom_call.1} parent=11 // pred_fallthru
          _
        // Predicated region
        $region29: #{tpu_custom_call.1} parent=11 // pred_check
          %p303 = pneg %p169
        $region30: #{tpu_custom_call.1} parent=11 // pred_check_branch
          %305 = sbr.rel (%p303) target = $region32
        $region31: #{tpu_custom_call.1} parent=11 // pred_region
          _
        $region32: #{tpu_custom_call.1} parent=11 // pred_fallthru
          _
        // Predicated region
        $region33: #{tpu_custom_call.1} parent=11 // pred_check
          %p306 = pneg %p190
        $region34: #{tpu_custom_call.1} parent=11 // pred_check_branch
          %308 = sbr.rel (%p306) target = $region36
        $region35: #{tpu_custom_call.1} parent=11 // pred_region
          _
        $region36: #{tpu_custom_call.1} parent=11 // pred_fallthru
          _
      $region12: #{tpu_custom_call.1} parent=5 // pred_fallthru
        _
      %p309 = scmp.lt.s32.totalorder %s26, 2
      // Predicated region
      $region37: #{tpu_custom_call.1} parent=5 // pred_check
        %p310 = pneg %p309
      $region38: #{tpu_custom_call.1} parent=5 // pred_check_branch
        %312 = sbr.rel (%p310) target = $region40
      $region39: #{tpu_custom_call.1} parent=5 // pred_region
        // Predicated region
        $region41: #{tpu_custom_call.1} parent=39 // pred_check
          %p313 = pneg %p58
        $region42: #{tpu_custom_call.1} parent=39 // pred_check_branch
          %315 = sbr.rel (%p313) target = $region44
        $region43: #{tpu_custom_call.1} parent=39 // pred_region
          %s316 = sand.u32 %s48, 1
          %s317 = scalar_lea.sflag [#allocation4], %s316
          %s318 = sand.u32 %s48, 1
          %s319 = smul.addr %s318, 56
          %s320 = scalar_lea.vmem [#allocation3], %s319
          %s322 = ssub.s32 896, 896
          %323 = vsyncadd %s317, %s322
          %s324 = smul.addr %s33, 7
          %s325 = smul.addr %s324, 128
          %s326 = scalar_lea.hbm %s0, %s325
          %s327 = sshll.u32 %s320, 4
          %s328 = int_to_ptr.vmem [resolvable:$true] %s327
          %333 = dma.hbm_to_vmem [thread:$0]  %s326, 896, %s328, %s317, 128, 128, 8
        $region44: #{tpu_custom_call.1} parent=39 // pred_fallthru
          _
      $region40: #{tpu_custom_call.1} parent=5 // pred_fallthru
        _
      %p334 = scmp.le.s32.totalorder 1, %s26
      %p335 = scmp.lt.s32.totalorder %s26, 3
      %p336 = pnand %p334, %p335
      %p337 = pneg %p336
      // Predicated region
      $region45: #{tpu_custom_call.1} parent=5 // pred_check
        _
      $region46: #{tpu_custom_call.1} parent=5 // pred_check_branch
        %339 = sbr.rel (%p336) target = $region48
      $region47: #{tpu_custom_call.1} parent=5 // pred_region
        %s340 = ssub.s32 %s26, 1
        %s341 = sand.u32 %s51, 1
        %s342 = scalar_lea.sflag [#allocation4], %s341
        %s343 = sand.u32 %s51, 1
        %s344 = smul.addr %s343, 56
        %s345 = scalar_lea.vmem [#allocation3], %s344
        // Predicated region
        $region49: #{tpu_custom_call.1} parent=47 // pred_check
          %p346 = pneg %p64
        $region50: #{tpu_custom_call.1} parent=47 // pred_check_branch
          %348 = sbr.rel (%p346) target = $region52
        $region51: #{tpu_custom_call.1} parent=47 // pred_region
          %349 = dma.done %s342, 896
        $region52: #{tpu_custom_call.1} parent=47 // pred_fallthru
          _
        // Predicated region
        $region53: #{tpu_custom_call.1} parent=47 // pred_check
          %p350 = pneg %p85
        $region54: #{tpu_custom_call.1} parent=47 // pred_check_branch
          %352 = sbr.rel (%p350) target = $region56
        $region55: #{tpu_custom_call.1} parent=47 // pred_region
          %353 = dma.done [#allocation7], 6144
        $region56: #{tpu_custom_call.1} parent=47 // pred_fallthru
          _
        // Predicated region
        $region57: #{tpu_custom_call.1} parent=47 // pred_check
          %p354 = pneg %p106
        $region58: #{tpu_custom_call.1} parent=47 // pred_check_branch
          %356 = sbr.rel (%p354) target = $region60
        $region59: #{tpu_custom_call.1} parent=47 // pred_region
          %357 = dma.done [#allocation7], 6144
        $region60: #{tpu_custom_call.1} parent=47 // pred_fallthru
          _
        // Predicated region
        $region61: #{tpu_custom_call.1} parent=47 // pred_check
          %p358 = pneg %p127
        $region62: #{tpu_custom_call.1} parent=47 // pred_check_branch
          %360 = sbr.rel (%p358) target = $region64
        $region63: #{tpu_custom_call.1} parent=47 // pred_region
          %361 = dma.done [#allocation10], 2048
        $region64: #{tpu_custom_call.1} parent=47 // pred_fallthru
          _
        %s362 = sand.u32 %s51, 1
        %s363 = scalar_lea.sflag [#allocation4], %s362
        %s364 = sand.u32 %s51, 1
        %s365 = smul.addr %s364, 56
        %s366 = scalar_lea.vmem [#allocation3], %s365
        %p367 = pneg %p64
        %p368 = pneg %p61
        %p369 = pneg %p85
        %p370 = pneg %p82
        %p371 = pneg %p106
        %p372 = pneg %p103
        %p373 = pneg %p127
        %p374 = pneg %p124
        %p375 = pneg %p148
        %p376 = pneg %p145
        %p377 = pneg %p169
        %p378 = pneg %p166
        %p379 = pneg %p190
        %p380 = pneg %p187
        %p381 = pneg %p218
        %p382 = pneg %p215
        %s383 = sand.u32 %s205, 1
        %s384 = scalar_lea.sflag [#allocation5], %s383
        %s385 = sand.u32 %s205, 1
        %s386 = smul.addr %s385, 16
        %s387 = scalar_lea.vmem [#allocation11], %s386
        %p388 = pneg %p246
        %p389 = pneg %p243
        %s390 = sand.u32 %s233, 1
        %s391 = scalar_lea.sflag [#allocation13], %s390
        %s392 = sand.u32 %s233, 1
        %s393 = smul.addr %s392, 16
        %s394 = scalar_lea.vmem [#allocation12], %s393
        %s395 = smul.u32 2, %s36
        %s396 = smul.u32 2, %s36
        %v397 = vld [vmem:[%s345] ss:$2 sm:$0xff]
        %s398 = scalar_lea.vmem %s345, 16 [#allocation3]
        %v399 = vld [vmem:[%s398] ss:$2 sm:$0xff]
        %s400 = scalar_lea.vmem %s345, 32 [#allocation3]
        %v401 = vld [vmem:[%s400] ss:$2 sm:$0xff]
        %v402 = vld [vmem:[#allocation6] sm:$0xff]
        %v403 = vld [vmem:[#allocation6 + $0x8] sm:$0xff]
        %v404 = vld [vmem:[#allocation6 + $0x10] sm:$0xff]
        %v405 = vld [vmem:[#allocation6 + $0x18] sm:$0xff]
        %v406 = vld [vmem:[#allocation6 + $0x20] sm:$0xff]
        %v407 = vld [vmem:[#allocation6 + $0x28] sm:$0xff]
        %v408 = vld [vmem:[#allocation6 + $0x30] sm:$0xff]
        %v409 = vld [vmem:[#allocation6 + $0x38] sm:$0xff]
        %v410 = vld [vmem:[#allocation6 + $0x40] sm:$0xff]
        %v411 = vld [vmem:[#allocation6 + $0x48] sm:$0xff]
        %v412 = vld [vmem:[#allocation6 + $0x50] sm:$0xff]
        %v413 = vld [vmem:[#allocation6 + $0x58] sm:$0xff]
        %v414 = vld [vmem:[#allocation6 + $0x60] sm:$0xff]
        %v415 = vld [vmem:[#allocation6 + $0x68] sm:$0xff]
        %v416 = vld [vmem:[#allocation6 + $0x70] sm:$0xff]
        %v417 = vld [vmem:[#allocation6 + $0x78] sm:$0xff]
        %s418 = scalar_lea.vmem %s345, 1 [#allocation3]
        %v419 = vld [vmem:[%s418] ss:$2 sm:$0xff]
        %s420 = scalar_lea.vmem %s345, 17 [#allocation3]
        %v421 = vld [vmem:[%s420] ss:$2 sm:$0xff]
        %s422 = scalar_lea.vmem %s345, 33 [#allocation3]
        %v423 = vld [vmem:[%s422] ss:$2 sm:$0xff]
        %s424 = scalar_lea.vmem [#allocation6], 128
        %v425 = vld [vmem:[%s424] sm:$0xff]
        %v426 = vld [vmem:[%s424 + $0x8] sm:$0xff]
        %v427 = vld [vmem:[%s424 + $0x10] sm:$0xff]
        %v428 = vld [vmem:[%s424 + $0x18] sm:$0xff]
        %v429 = vld [vmem:[%s424 + $0x20] sm:$0xff]
        %v430 = vld [vmem:[%s424 + $0x28] sm:$0xff]
        %v431 = vld [vmem:[%s424 + $0x30] sm:$0xff]
        %v432 = vld [vmem:[%s424 + $0x38] sm:$0xff]
        %v433 = vld [vmem:[%s424 + $0x40] sm:$0xff]
        %v434 = vld [vmem:[%s424 + $0x48] sm:$0xff]
        %v435 = vld [vmem:[%s424 + $0x50] sm:$0xff]
        %v436 = vld [vmem:[%s424 + $0x58] sm:$0xff]
        %v437 = vld [vmem:[%s424 + $0x60] sm:$0xff]
        %v438 = vld [vmem:[%s424 + $0x68] sm:$0xff]
        %v439 = vld [vmem:[%s424 + $0x70] sm:$0xff]
        %v440 = vld [vmem:[%s424 + $0x78] sm:$0xff]
        %441 = vmatprep.subr.mxu0 0.0
        %442 = vmatpush1.msra.mxu0 %v425
        %443 = vmatprep.subr.mxu0 0.0
        %444 = vmatpush1.msra.mxu0 %v426
        %445 = vmatprep.subr.mxu0 0.0
        %446 = vmatpush1.msra.mxu0 %v427
        %447 = vmatprep.subr.mxu0 0.0
        %448 = vmatpush1.msra.mxu0 %v428
        %449 = vmatprep.subr.mxu0 0.0
        %450 = vmatpush1.msra.mxu0 %v429
        %451 = vmatprep.subr.mxu0 0.0
        %452 = vmatpush1.msra.mxu0 %v430
        %453 = vmatprep.subr.mxu0 0.0
        %454 = vmatpush1.msra.mxu0 %v431
        %455 = vmatprep.subr.mxu0 0.0
        %456 = vmatpush1.msra.mxu0 %v432
        %457 = vmatprep.subr.mxu0 0.0
        %458 = vmatpush1.msra.mxu0 %v433
        %459 = vmatprep.subr.mxu0 0.0
        %460 = vmatpush1.msra.mxu0 %v434
        %461 = vmatprep.subr.mxu0 0.0
        %462 = vmatpush1.msra.mxu0 %v435
        %463 = vmatprep.subr.mxu0 0.0
        %464 = vmatpush1.msra.mxu0 %v436
        %465 = vmatprep.subr.mxu0 0.0
        %466 = vmatpush1.msra.mxu0 %v437
        %467 = vmatprep.subr.mxu0 0.0
        %468 = vmatpush1.msra.mxu0 %v438
        %469 = vmatprep.subr.mxu0 0.0
        %470 = vmatpush1.msra.mxu0 %v439
        %471 = vmatprep.subr.mxu0 0.0
        %472 = vmatpush1.msra.mxu0 %v440
        %473 = vmatprep.subr.mxu0 0.0
        %474 = vmatpush1.msra.mxu0 0.0
        %475 = vmatprep.subr.mxu0 0.0
        %476 = vmatpush1.msra.mxu0 0.0
        %477 = vmatprep.subr.mxu0 0.0
        %478 = vmatpush1.msra.mxu0 0.0
        %479 = vmatprep.subr.mxu0 0.0
        %480 = vmatpush1.msra.mxu0 0.0
        %481 = vmatprep.subr.mxu0 0.0
        %482 = vmatpush1.msra.mxu0 0.0
        %483 = vmatprep.subr.mxu0 0.0
        %484 = vmatpush1.msra.mxu0 0.0
        %485 = vmatprep.subr.mxu0 0.0
        %486 = vmatpush1.msra.mxu0 0.0
        %487 = vmatprep.subr.mxu0 0.0
        %488 = vmatpush1.msra.mxu0 0.0
        %489 = vmatprep.subr.mxu0 0.0
        %490 = vmatpush1.msra.mxu0 0.0
        %491 = vmatprep.subr.mxu0 0.0
        %492 = vmatpush1.msra.mxu0 0.0
        %493 = vmatprep.subr.mxu0 0.0
        %494 = vmatpush1.msra.mxu0 0.0
        %495 = vmatprep.subr.mxu0 0.0
        %496 = vmatpush1.msra.mxu0 0.0
        %497 = vmatprep.subr.mxu0 0.0
        %498 = vmatpush1.msra.mxu0 0.0
        %499 = vmatprep.subr.mxu0 0.0
        %500 = vmatpush1.msra.mxu0 0.0
        %501 = vmatprep.subr.mxu0 0.0
        %502 = vmatpush1.msra.mxu0 0.0
        %503 = vmatprep.subr.mxu0 0.0
        %504 = vmatpush1.msra.mxu0 0.0
        %505 = vmatprep.mubr.f32.mxu0 0.0
        %506 = vmatmul.mubr.f32.gmra.mrb[0].mxu0 %v419
        %v507 = vpop.f32.mrb[0].mxu0
        %v508 = vadd.f32 0.0, %v507
        %v509 = vpop.f32.mrb[0].mxu0
        %510 = vmatprep.mubr.f32.mxu0 0.0
        %511 = vmatmul.mubr.f32.gmra.mrb[0].mxu0 %v421
        %v512 = vpop.f32.mrb[0].mxu0
        %v513 = vadd.f32 0.0, %v512
        %v514 = vpop.f32.mrb[0].mxu0
        %515 = vmatprep.mubr.f32.mxu0 0.0
        %516 = vmatmul.mubr.f32.gmra.mrb[0].mxu0 %v423
        %v517 = vpop.f32.mrb[0].mxu0
        %v518 = vadd.f32 0.0, %v517
        %v519 = vpop.f32.mrb[0].mxu0
        %520 = vdwg.mxu0
        %521 = vmatprep.subr.mxu0 0.0
        %522 = vmatpush1.msra.mxu0 %v402
        %523 = vmatprep.subr.mxu0 0.0
        %524 = vmatpush1.msra.mxu0 %v403
        %525 = vmatprep.subr.mxu0 0.0
        %526 = vmatpush1.msra.mxu0 %v404
        %527 = vmatprep.subr.mxu0 0.0
        %528 = vmatpush1.msra.mxu0 %v405
        %529 = vmatprep.subr.mxu0 0.0
        %530 = vmatpush1.msra.mxu0 %v406
        %531 = vmatprep.subr.mxu0 0.0
        %532 = vmatpush1.msra.mxu0 %v407
        %533 = vmatprep.subr.mxu0 0.0
        %534 = vmatpush1.msra.mxu0 %v408
        %535 = vmatprep.subr.mxu0 0.0
        %536 = vmatpush1.msra.mxu0 %v409
        %537 = vmatprep.subr.mxu0 0.0
        %538 = vmatpush1.msra.mxu0 %v410
        %539 = vmatprep.subr.mxu0 0.0
        %540 = vmatpush1.msra.mxu0 %v411
        %541 = vmatprep.subr.mxu0 0.0
        %542 = vmatpush1.msra.mxu0 %v412
        %543 = vmatprep.subr.mxu0 0.0
        %544 = vmatpush1.msra.mxu0 %v413
        %545 = vmatprep.subr.mxu0 0.0
        %546 = vmatpush1.msra.mxu0 %v414
        %547 = vmatprep.subr.mxu0 0.0
        %548 = vmatpush1.msra.mxu0 %v415
        %549 = vmatprep.subr.mxu0 0.0
        %550 = vmatpush1.msra.mxu0 %v416
        %551 = vmatprep.subr.mxu0 0.0
        %552 = vmatpush1.msra.mxu0 %v417
        %553 = vmatprep.subr.mxu0 0.0
        %554 = vmatpush1.msra.mxu0 0.0
        %555 = vmatprep.subr.mxu0 0.0
        %556 = vmatpush1.msra.mxu0 0.0
        %557 = vmatprep.subr.mxu0 0.0
        %558 = vmatpush1.msra.mxu0 0.0
        %559 = vmatprep.subr.mxu0 0.0
        %560 = vmatpush1.msra.mxu0 0.0
        %561 = vmatprep.subr.mxu0 0.0
        %562 = vmatpush1.msra.mxu0 0.0
        %563 = vmatprep.subr.mxu0 0.0
        %564 = vmatpush1.msra.mxu0 0.0
        %565 = vmatprep.subr.mxu0 0.0
        %566 = vmatpush1.msra.mxu0 0.0
        %567 = vmatprep.subr.mxu0 0.0
        %568 = vmatpush1.msra.mxu0 0.0
        %569 = vmatprep.subr.mxu0 0.0
        %570 = vmatpush1.msra.mxu0 0.0
        %571 = vmatprep.subr.mxu0 0.0
        %572 = vmatpush1.msra.mxu0 0.0
        %573 = vmatprep.subr.mxu0 0.0
        %574 = vmatpush1.msra.mxu0 0.0
        %575 = vmatprep.subr.mxu0 0.0
        %576 = vmatpush1.msra.mxu0 0.0
        %577 = vmatprep.subr.mxu0 0.0
        %578 = vmatpush1.msra.mxu0 0.0
        %579 = vmatprep.subr.mxu0 0.0
        %580 = vmatpush1.msra.mxu0 0.0
        %581 = vmatprep.subr.mxu0 0.0
        %582 = vmatpush1.msra.mxu0 0.0
        %583 = vmatprep.subr.mxu0 0.0
        %584 = vmatpush1.msra.mxu0 0.0
        %585 = vmatprep.mubr.f32.mxu0 0.0
        %586 = vmatmul.mubr.f32.gmra.mrb[0].mxu0 %v397
        %v587 = vpop.f32.mrb[0].mxu0
        %v588 = vadd.f32 %v508, %v587
        %v589 = vpop.f32.mrb[0].mxu0
        %590 = vmatprep.mubr.f32.mxu0 0.0
        %591 = vmatmul.mubr.f32.gmra.mrb[0].mxu0 %v399
        %v592 = vpop.f32.mrb[0].mxu0
        %v593 = vadd.f32 %v513, %v592
        %v594 = vpop.f32.mrb[0].mxu0
        %595 = vmatprep.mubr.f32.mxu0 0.0
        %596 = vmatmul.mubr.f32.gmra.mrb[0].mxu0 %v401
        %v597 = vpop.f32.mrb[0].mxu0
        %v598 = vadd.f32 %v518, %v597
        %v599 = vpop.f32.mrb[0].mxu0
        %600 = vdwg.mxu0
        %s601 = scalar_lea.vmem %s345, 2 [#allocation3]
        %v602 = vld [vmem:[%s601] ss:$2 sm:$0xff]
        %s603 = scalar_lea.vmem %s345, 18 [#allocation3]
        %v604 = vld [vmem:[%s603] ss:$2 sm:$0xff]
        %s605 = scalar_lea.vmem %s345, 34 [#allocation3]
        %v606 = vld [vmem:[%s605] ss:$2 sm:$0xff]
        %s607 = scalar_lea.vmem [#allocation6], 256
        %v608 = vld [vmem:[%s607] sm:$0xff]
        %v609 = vld [vmem:[%s607 + $0x8] sm:$0xff]
        %v610 = vld [vmem:[%s607 + $0x10] sm:$0xff]
        %v611 = vld [vmem:[%s607 + $0x18] sm:$0xff]
        %v612 = vld [vmem:[%s607 + $0x20] sm:$0xff]
        %v613 = vld [vmem:[%s607 + $0x28] sm:$0xff]
        %v614 = vld [vmem:[%s607 + $0x30] sm:$0xff]
        %v615 = vld [vmem:[%s607 + $0x38] sm:$0xff]
        %v616 = vld [vmem:[%s607 + $0x40] sm:$0xff]
        %v617 = vld [vmem:[%s607 + $0x48] sm:$0xff]
        %v618 = vld [vmem:[%s607 + $0x50] sm:$0xff]
        %v619 = vld [vmem:[%s607 + $0x58] sm:$0xff]
        %v620 = vld [vmem:[%s607 + $0x60] sm:$0xff]
        %v621 = vld [vmem:[%s607 + $0x68] sm:$0xff]
        %v622 = vld [vmem:[%s607 + $0x70] sm:$0xff]
        %v623 = vld [vmem:[%s607 + $0x78] sm:$0xff]
        %624 = vmatprep.subr.mxu0 0.0
        %625 = vmatpush1.msra.mxu0 %v608
        %626 = vmatprep.subr.mxu0 0.0
        %627 = vmatpush1.msra.mxu0 %v609
        %628 = vmatprep.subr.mxu0 0.0
        %629 = vmatpush1.msra.mxu0 %v610
        %630 = vmatprep.subr.mxu0 0.0
        %631 = vmatpush1.msra.mxu0 %v611
        %632 = vmatprep.subr.mxu0 0.0
        %633 = vmatpush1.msra.mxu0 %v612
        %634 = vmatprep.subr.mxu0 0.0
        %635 = vmatpush1.msra.mxu0 %v613
        %636 = vmatprep.subr.mxu0 0.0
        %637 = vmatpush1.msra.mxu0 %v614
        %638 = vmatprep.subr.mxu0 0.0
        %639 = vmatpush1.msra.mxu0 %v615
        %640 = vmatprep.subr.mxu0 0.0
        %641 = vmatpush1.msra.mxu0 %v616
        %642 = vmatprep.subr.mxu0 0.0
        %643 = vmatpush1.msra.mxu0 %v617
        %644 = vmatprep.subr.mxu0 0.0
        %645 = vmatpush1.msra.mxu0 %v618
        %646 = vmatprep.subr.mxu0 0.0
        %647 = vmatpush1.msra.mxu0 %v619
        %648 = vmatprep.subr.mxu0 0.0
        %649 = vmatpush1.msra.mxu0 %v620
        %650 = vmatprep.subr.mxu0 0.0
        %651 = vmatpush1.msra.mxu0 %v621
        %652 = vmatprep.subr.mxu0 0.0
        %653 = vmatpush1.msra.mxu0 %v622
        %654 = vmatprep.subr.mxu0 0.0
        %655 = vmatpush1.msra.mxu0 %v623
        %656 = vmatprep.subr.mxu0 0.0
        %657 = vmatpush1.msra.mxu0 0.0
        %658 = vmatprep.subr.mxu0 0.0
        %659 = vmatpush1.msra.mxu0 0.0
        %660 = vmatprep.subr.mxu0 0.0
        %661 = vmatpush1.msra.mxu0 0.0
        %662 = vmatprep.subr.mxu0 0.0
        %663 = vmatpush1.msra.mxu0 0.0
        %664 = vmatprep.subr.mxu0 0.0
        %665 = vmatpush1.msra.mxu0 0.0
        %666 = vmatprep.subr.mxu0 0.0
        %667 = vmatpush1.msra.mxu0 0.0
        %668 = vmatprep.subr.mxu0 0.0
        %669 = vmatpush1.msra.mxu0 0.0
        %670 = vmatprep.subr.mxu0 0.0
        %671 = vmatpush1.msra.mxu0 0.0
        %672 = vmatprep.subr.mxu0 0.0
        %673 = vmatpush1.msra.mxu0 0.0
        %674 = vmatprep.subr.mxu0 0.0
        %675 = vmatpush1.msra.mxu0 0.0
        %676 = vmatprep.subr.mxu0 0.0
        %677 = vmatpush1.msra.mxu0 0.0
        %678 = vmatprep.subr.mxu0 0.0
        %679 = vmatpush1.msra.mxu0 0.0
        %680 = vmatprep.subr.mxu0 0.0
        %681 = vmatpush1.msra.mxu0 0.0
        %682 = vmatprep.subr.mxu0 0.0
        %683 = vmatpush1.msra.mxu0 0.0
        %684 = vmatprep.subr.mxu0 0.0
        %685 = vmatpush1.msra.mxu0 0.0
        %686 = vmatprep.subr.mxu0 0.0
        %687 = vmatpush1.msra.mxu0 0.0
        %688 = vmatprep.mubr.f32.mxu0 0.0
        %689 = vmatmul.mubr.f32.gmra.mrb[0].mxu0 %v602
        %v690 = vpop.f32.mrb[0].mxu0
        %v691 = vadd.f32 0.0, %v690
        %v692 = vpop.f32.mrb[0].mxu0
        %693 = vmatprep.mubr.f32.mxu0 0.0
        %694 = vmatmul.mubr.f32.gmra.mrb[0].mxu0 %v604
        %v695 = vpop.f32.mrb[0].mxu0
        %v696 = vadd.f32 0.0, %v695
        %v697 = vpop.f32.mrb[0].mxu0
        %698 = vmatprep.mubr.f32.mxu0 0.0
        %699 = vmatmul.mubr.f32.gmra.mrb[0].mxu0 %v606
        %v700 = vpop.f32.mrb[0].mxu0
        %v701 = vadd.f32 0.0, %v700
        %v702 = vpop.f32.mrb[0].mxu0
        %703 = vdwg.mxu0
        %v704 = vadd.f32 %v588, %v691
        %v705 = vadd.f32 %v593, %v696
        %v706 = vadd.f32 %v598, %v701
        %v707 = vld [vmem:[%s4] sm:$0x1]
        %v709 = vlaneseq
        %v710 = vshrl.u32 %v709, 7
        %v711 = vsub.s32 0, %v710
        %v712 = vrot.slane %v707, %v711
        %v714 = vadd.f32 %v704, %v712
        %v715 = vadd.f32 %v705, %v712
        %v716 = vadd.f32 %v706, %v712
        %v717 = vmax.f32 %v714, 0.0
        %v718 = vmax.f32 %v715, 0.0
        %v719 = vmax.f32 %v716, 0.0
        %720 = vst [vmem:[#allocation2] sm:$0xff] %v717
        %721 = vst [vmem:[#allocation2 + $0x8] sm:$0xff] %v718
        %722 = vst [vmem:[#allocation2 + $0x10] sm:$0xff] %v719
        %p723 = scmp.eq.s32.totalorder %s36, 0
        // Predicated region
        $region65: #{tpu_custom_call.1} parent=47 // pred_check
          %p724 = pneg %p723
        $region66: #{tpu_custom_call.1} parent=47 // pred_check_branch
          %726 = sbr.rel (%p724) target = $region68
        $region67: #{tpu_custom_call.1} parent=47 // pred_region
          %727 = vst [vmem:[#allocation2] sm:$0x1] 0.0
          %728 = vst [vmem:[#allocation2 + $0x11] sm:$0x1] 0.0
        $region68: #{tpu_custom_call.1} parent=47 // pred_fallthru
          _
        %v729 = vld [vmem:[#allocation2] sm:$0xff]
        %v730 = vld [vmem:[#allocation2 + $0x8] sm:$0xff]
        %v731 = vld [vmem:[#allocation8] sm:$0xff]
        %v732 = vld [vmem:[#allocation8 + $0x8] sm:$0xff]
        %v733 = vld [vmem:[#allocation8 + $0x10] sm:$0xff]
        %v734 = vld [vmem:[#allocation8 + $0x18] sm:$0xff]
        %v735 = vld [vmem:[#allocation8 + $0x20] sm:$0xff]
        %v736 = vld [vmem:[#allocation8 + $0x28] sm:$0xff]
        %v737 = vld [vmem:[#allocation8 + $0x30] sm:$0xff]
        %v738 = vld [vmem:[#allocation8 + $0x38] sm:$0xff]
        %v739 = vld [vmem:[#allocation8 + $0x40] sm:$0xff]
        %v740 = vld [vmem:[#allocation8 + $0x48] sm:$0xff]
        %v741 = vld [vmem:[#allocation8 + $0x50] sm:$0xff]
        %v742 = vld [vmem:[#allocation8 + $0x58] sm:$0xff]
        %v743 = vld [vmem:[#allocation8 + $0x60] sm:$0xff]
        %v744 = vld [vmem:[#allocation8 + $0x68] sm:$0xff]
        %v745 = vld [vmem:[#allocation8 + $0x70] sm:$0xff]
        %v746 = vld [vmem:[#allocation8 + $0x78] sm:$0xff]
        %v747 = vld [vmem:[#allocation2 + $0x1] sm:$0xff]
        %v748 = vld [vmem:[#allocation2 + $0x9] sm:$0xff]
        %s749 = scalar_lea.vmem [#allocation8], 128
        %v750 = vld [vmem:[%s749] sm:$0xff]
        %v751 = vld [vmem:[%s749 + $0x8] sm:$0xff]
        %v752 = vld [vmem:[%s749 + $0x10] sm:$0xff]
        %v753 = vld [vmem:[%s749 + $0x18] sm:$0xff]
        %v754 = vld [vmem:[%s749 + $0x20] sm:$0xff]
        %v755 = vld [vmem:[%s749 + $0x28] sm:$0xff]
        %v756 = vld [vmem:[%s749 + $0x30] sm:$0xff]
        %v757 = vld [vmem:[%s749 + $0x38] sm:$0xff]
        %v758 = vld [vmem:[%s749 + $0x40] sm:$0xff]
        %v759 = vld [vmem:[%s749 + $0x48] sm:$0xff]
        %v760 = vld [vmem:[%s749 + $0x50] sm:$0xff]
        %v761 = vld [vmem:[%s749 + $0x58] sm:$0xff]
        %v762 = vld [vmem:[%s749 + $0x60] sm:$0xff]
        %v763 = vld [vmem:[%s749 + $0x68] sm:$0xff]
        %v764 = vld [vmem:[%s749 + $0x70] sm:$0xff]
        %v765 = vld [vmem:[%s749 + $0x78] sm:$0xff]
        %766 = vmatprep.subr.mxu0 0.0
        %767 = vmatpush1.msra.mxu0 %v750
        %768 = vmatprep.subr.mxu0 0.0
        %769 = vmatpush1.msra.mxu0 %v751
        %770 = vmatprep.subr.mxu0 0.0
        %771 = vmatpush1.msra.mxu0 %v752
        %772 = vmatprep.subr.mxu0 0.0
        %773 = vmatpush1.msra.mxu0 %v753
        %774 = vmatprep.subr.mxu0 0.0
        %775 = vmatpush1.msra.mxu0 %v754
        %776 = vmatprep.subr.mxu0 0.0
        %777 = vmatpush1.msra.mxu0 %v755
        %778 = vmatprep.subr.mxu0 0.0
        %779 = vmatpush1.msra.mxu0 %v756
        %780 = vmatprep.subr.mxu0 0.0
        %781 = vmatpush1.msra.mxu0 %v757
        %782 = vmatprep.subr.mxu0 0.0
        %783 = vmatpush1.msra.mxu0 %v758
        %784 = vmatprep.subr.mxu0 0.0
        %785 = vmatpush1.msra.mxu0 %v759
        %786 = vmatprep.subr.mxu0 0.0
        %787 = vmatpush1.msra.mxu0 %v760
        %788 = vmatprep.subr.mxu0 0.0
        %789 = vmatpush1.msra.mxu0 %v761
        %790 = vmatprep.subr.mxu0 0.0
        %791 = vmatpush1.msra.mxu0 %v762
        %792 = vmatprep.subr.mxu0 0.0
        %793 = vmatpush1.msra.mxu0 %v763
        %794 = vmatprep.subr.mxu0 0.0
        %795 = vmatpush1.msra.mxu0 %v764
        %796 = vmatprep.subr.mxu0 0.0
        %797 = vmatpush1.msra.mxu0 %v765
        %798 = vmatprep.subr.mxu0 0.0
        %799 = vmatpush1.msra.mxu0 0.0
        %800 = vmatprep.subr.mxu0 0.0
        %801 = vmatpush1.msra.mxu0 0.0
        %802 = vmatprep.subr.mxu0 0.0
        %803 = vmatpush1.msra.mxu0 0.0
        %804 = vmatprep.subr.mxu0 0.0
        %805 = vmatpush1.msra.mxu0 0.0
        %806 = vmatprep.subr.mxu0 0.0
        %807 = vmatpush1.msra.mxu0 0.0
        %808 = vmatprep.subr.mxu0 0.0
        %809 = vmatpush1.msra.mxu0 0.0
        %810 = vmatprep.subr.mxu0 0.0
        %811 = vmatpush1.msra.mxu0 0.0
        %812 = vmatprep.subr.mxu0 0.0
        %813 = vmatpush1.msra.mxu0 0.0
        %814 = vmatprep.subr.mxu0 0.0
        %815 = vmatpush1.msra.mxu0 0.0
        %816 = vmatprep.subr.mxu0 0.0
        %817 = vmatpush1.msra.mxu0 0.0
        %818 = vmatprep.subr.mxu0 0.0
        %819 = vmatpush1.msra.mxu0 0.0
        %820 = vmatprep.subr.mxu0 0.0
        %821 = vmatpush1.msra.mxu0 0.0
        %822 = vmatprep.subr.mxu0 0.0
        %823 = vmatpush1.msra.mxu0 0.0
        %824 = vmatprep.subr.mxu0 0.0
        %825 = vmatpush1.msra.mxu0 0.0
        %826 = vmatprep.subr.mxu0 0.0
        %827 = vmatpush1.msra.mxu0 0.0
        %828 = vmatprep.subr.mxu0 0.0
        %829 = vmatpush1.msra.mxu0 0.0
        %830 = vmatprep.mubr.f32.mxu0 0.0
        %831 = vmatmul.mubr.f32.gmra.mrb[0].mxu0 %v747
        %v832 = vpop.f32.mrb[0].mxu0
        %v833 = vadd.f32 0.0, %v832
        %v834 = vpop.f32.mrb[0].mxu0
        %835 = vmatprep.mubr.f32.mxu0 0.0
        %836 = vmatmul.mubr.f32.gmra.mrb[0].mxu0 %v748
        %v837 = vpop.f32.mrb[0].mxu0
        %v838 = vadd.f32 0.0, %v837
        %v839 = vpop.f32.mrb[0].mxu0
        %840 = vdwg.mxu0
        %841 = vmatprep.subr.mxu0 0.0
        %842 = vmatpush1.msra.mxu0 %v731
        %843 = vmatprep.subr.mxu0 0.0
        %844 = vmatpush1.msra.mxu0 %v732
        %845 = vmatprep.subr.mxu0 0.0
        %846 = vmatpush1.msra.mxu0 %v733
        %847 = vmatprep.subr.mxu0 0.0
        %848 = vmatpush1.msra.mxu0 %v734
        %849 = vmatprep.subr.mxu0 0.0
        %850 = vmatpush1.msra.mxu0 %v735
        %851 = vmatprep.subr.mxu0 0.0
        %852 = vmatpush1.msra.mxu0 %v736
        %853 = vmatprep.subr.mxu0 0.0
        %854 = vmatpush1.msra.mxu0 %v737
        %855 = vmatprep.subr.mxu0 0.0
        %856 = vmatpush1.msra.mxu0 %v738
        %857 = vmatprep.subr.mxu0 0.0
        %858 = vmatpush1.msra.mxu0 %v739
        %859 = vmatprep.subr.mxu0 0.0
        %860 = vmatpush1.msra.mxu0 %v740
        %861 = vmatprep.subr.mxu0 0.0
        %862 = vmatpush1.msra.mxu0 %v741
        %863 = vmatprep.subr.mxu0 0.0
        %864 = vmatpush1.msra.mxu0 %v742
        %865 = vmatprep.subr.mxu0 0.0
        %866 = vmatpush1.msra.mxu0 %v743
        %867 = vmatprep.subr.mxu0 0.0
        %868 = vmatpush1.msra.mxu0 %v744
        %869 = vmatprep.subr.mxu0 0.0
        %870 = vmatpush1.msra.mxu0 %v745
        %871 = vmatprep.subr.mxu0 0.0
        %872 = vmatpush1.msra.mxu0 %v746
        %873 = vmatprep.subr.mxu0 0.0
        %874 = vmatpush1.msra.mxu0 0.0
        %875 = vmatprep.subr.mxu0 0.0
        %876 = vmatpush1.msra.mxu0 0.0
        %877 = vmatprep.subr.mxu0 0.0
        %878 = vmatpush1.msra.mxu0 0.0
        %879 = vmatprep.subr.mxu0 0.0
        %880 = vmatpush1.msra.mxu0 0.0
        %881 = vmatprep.subr.mxu0 0.0
        %882 = vmatpush1.msra.mxu0 0.0
        %883 = vmatprep.subr.mxu0 0.0
        %884 = vmatpush1.msra.mxu0 0.0
        %885 = vmatprep.subr.mxu0 0.0
        %886 = vmatpush1.msra.mxu0 0.0
        %887 = vmatprep.subr.mxu0 0.0
        %888 = vmatpush1.msra.mxu0 0.0
        %889 = vmatprep.subr.mxu0 0.0
        %890 = vmatpush1.msra.mxu0 0.0
        %891 = vmatprep.subr.mxu0 0.0
        %892 = vmatpush1.msra.mxu0 0.0
        %893 = vmatprep.subr.mxu0 0.0
        %894 = vmatpush1.msra.mxu0 0.0
        %895 = vmatprep.subr.mxu0 0.0
        %896 = vmatpush1.msra.mxu0 0.0
        %897 = vmatprep.subr.mxu0 0.0
        %898 = vmatpush1.msra.mxu0 0.0
        %899 = vmatprep.subr.mxu0 0.0
        %900 = vmatpush1.msra.mxu0 0.0
        %901 = vmatprep.subr.mxu0 0.0
        %902 = vmatpush1.msra.mxu0 0.0
        %903 = vmatprep.subr.mxu0 0.0
        %904 = vmatpush1.msra.mxu0 0.0
        %905 = vmatprep.mubr.f32.mxu0 0.0
        %906 = vmatmul.mubr.f32.gmra.mrb[0].mxu0 %v729
        %v907 = vpop.f32.mrb[0].mxu0
        %v908 = vadd.f32 %v833, %v907
        %v909 = vpop.f32.mrb[0].mxu0
        %910 = vmatprep.mubr.f32.mxu0 0.0
        %911 = vmatmul.mubr.f32.gmra.mrb[0].mxu0 %v730
        %v912 = vpop.f32.mrb[0].mxu0
        %v913 = vadd.f32 %v838, %v912
        %v914 = vpop.f32.mrb[0].mxu0
        %915 = vdwg.mxu0
        %v916 = vld [vmem:[#allocation2 + $0x2] sm:$0xff]
        %v917 = vld [vmem:[#allocation2 + $0xa] sm:$0xff]
        %s918 = scalar_lea.vmem [#allocation8], 256
        %v919 = vld [vmem:[%s918] sm:$0xff]
        %v920 = vld [vmem:[%s918 + $0x8] sm:$0xff]
        %v921 = vld [vmem:[%s918 + $0x10] sm:$0xff]
        %v922 = vld [vmem:[%s918 + $0x18] sm:$0xff]
        %v923 = vld [vmem:[%s918 + $0x20] sm:$0xff]
        %v924 = vld [vmem:[%s918 + $0x28] sm:$0xff]
        %v925 = vld [vmem:[%s918 + $0x30] sm:$0xff]
        %v926 = vld [vmem:[%s918 + $0x38] sm:$0xff]
        %v927 = vld [vmem:[%s918 + $0x40] sm:$0xff]
        %v928 = vld [vmem:[%s918 + $0x48] sm:$0xff]
        %v929 = vld [vmem:[%s918 + $0x50] sm:$0xff]
        %v930 = vld [vmem:[%s918 + $0x58] sm:$0xff]
        %v931 = vld [vmem:[%s918 + $0x60] sm:$0xff]
        %v932 = vld [vmem:[%s918 + $0x68] sm:$0xff]
        %v933 = vld [vmem:[%s918 + $0x70] sm:$0xff]
        %v934 = vld [vmem:[%s918 + $0x78] sm:$0xff]
        %935 = vmatprep.subr.mxu0 0.0
        %936 = vmatpush1.msra.mxu0 %v919
        %937 = vmatprep.subr.mxu0 0.0
        %938 = vmatpush1.msra.mxu0 %v920
        %939 = vmatprep.subr.mxu0 0.0
        %940 = vmatpush1.msra.mxu0 %v921
        %941 = vmatprep.subr.mxu0 0.0
        %942 = vmatpush1.msra.mxu0 %v922
        %943 = vmatprep.subr.mxu0 0.0
        %944 = vmatpush1.msra.mxu0 %v923
        %945 = vmatprep.subr.mxu0 0.0
        %946 = vmatpush1.msra.mxu0 %v924
        %947 = vmatprep.subr.mxu0 0.0
        %948 = vmatpush1.msra.mxu0 %v925
        %949 = vmatprep.subr.mxu0 0.0
        %950 = vmatpush1.msra.mxu0 %v926
        %951 = vmatprep.subr.mxu0 0.0
        %952 = vmatpush1.msra.mxu0 %v927
        %953 = vmatprep.subr.mxu0 0.0
        %954 = vmatpush1.msra.mxu0 %v928
        %955 = vmatprep.subr.mxu0 0.0
        %956 = vmatpush1.msra.mxu0 %v929
        %957 = vmatprep.subr.mxu0 0.0
        %958 = vmatpush1.msra.mxu0 %v930
        %959 = vmatprep.subr.mxu0 0.0
        %960 = vmatpush1.msra.mxu0 %v931
        %961 = vmatprep.subr.mxu0 0.0
        %962 = vmatpush1.msra.mxu0 %v932
        %963 = vmatprep.subr.mxu0 0.0
        %964 = vmatpush1.msra.mxu0 %v933
        %965 = vmatprep.subr.mxu0 0.0
        %966 = vmatpush1.msra.mxu0 %v934
        %967 = vmatprep.subr.mxu0 0.0
        %968 = vmatpush1.msra.mxu0 0.0
        %969 = vmatprep.subr.mxu0 0.0
        %970 = vmatpush1.msra.mxu0 0.0
        %971 = vmatprep.subr.mxu0 0.0
        %972 = vmatpush1.msra.mxu0 0.0
        %973 = vmatprep.subr.mxu0 0.0
        %974 = vmatpush1.msra.mxu0 0.0
        %975 = vmatprep.subr.mxu0 0.0
        %976 = vmatpush1.msra.mxu0 0.0
        %977 = vmatprep.subr.mxu0 0.0
        %978 = vmatpush1.msra.mxu0 0.0
        %979 = vmatprep.subr.mxu0 0.0
        %980 = vmatpush1.msra.mxu0 0.0
        %981 = vmatprep.subr.mxu0 0.0
        %982 = vmatpush1.msra.mxu0 0.0
        %983 = vmatprep.subr.mxu0 0.0
        %984 = vmatpush1.msra.mxu0 0.0
        %985 = vmatprep.subr.mxu0 0.0
        %986 = vmatpush1.msra.mxu0 0.0
        %987 = vmatprep.subr.mxu0 0.0
        %988 = vmatpush1.msra.mxu0 0.0
        %989 = vmatprep.subr.mxu0 0.0
        %990 = vmatpush1.msra.mxu0 0.0
        %991 = vmatprep.subr.mxu0 0.0
        %992 = vmatpush1.msra.mxu0 0.0
        %993 = vmatprep.subr.mxu0 0.0
        %994 = vmatpush1.msra.mxu0 0.0
        %995 = vmatprep.subr.mxu0 0.0
        %996 = vmatpush1.msra.mxu0 0.0
        %997 = vmatprep.subr.mxu0 0.0
        %998 = vmatpush1.msra.mxu0 0.0
        %999 = vmatprep.mubr.f32.mxu0 0.0
        %1000 = vmatmul.mubr.f32.gmra.mrb[0].mxu0 %v916
        %v1001 = vpop.f32.mrb[0].mxu0
        %v1002 = vadd.f32 0.0, %v1001
        %v1003 = vpop.f32.mrb[0].mxu0
        %1004 = vmatprep.mubr.f32.mxu0 0.0
        %1005 = vmatmul.mubr.f32.gmra.mrb[0].mxu0 %v917
        %v1006 = vpop.f32.mrb[0].mxu0
        %v1007 = vadd.f32 0.0, %v1006
        %v1008 = vpop.f32.mrb[0].mxu0
        %1009 = vdwg.mxu0
        %v1010 = vadd.f32 %v908, %v1002
        %v1011 = vadd.f32 %v913, %v1007
        %v1012 = vld [vmem:[%s5] sm:$0x1]
        %v1014 = vlaneseq
        %v1015 = vshrl.u32 %v1014, 7
        %v1016 = vsub.s32 0, %v1015
        %v1017 = vrot.slane %v1012, %v1016
        %v1019 = vadd.f32 %v1010, %v1017
        %v1020 = vadd.f32 %v1011, %v1017
        %s1021 = scalar_lea.vmem %s345, 3 [#allocation3]
        %v1022 = vld [vmem:[%s1021] ss:$2 sm:$0xff]
        %s1023 = scalar_lea.vmem %s345, 19 [#allocation3]
        %v1024 = vld [vmem:[%s1023] ss:$2 sm:$0xff]
        %v1025 = vld [vmem:[#allocation9] sm:$0xff]
        %v1026 = vld [vmem:[#allocation9 + $0x8] sm:$0xff]
        %v1027 = vld [vmem:[#allocation9 + $0x10] sm:$0xff]
        %v1028 = vld [vmem:[#allocation9 + $0x18] sm:$0xff]
        %v1029 = vld [vmem:[#allocation9 + $0x20] sm:$0xff]
        %v1030 = vld [vmem:[#allocation9 + $0x28] sm:$0xff]
        %v1031 = vld [vmem:[#allocation9 + $0x30] sm:$0xff]
        %v1032 = vld [vmem:[#allocation9 + $0x38] sm:$0xff]
        %v1033 = vld [vmem:[#allocation9 + $0x40] sm:$0xff]
        %v1034 = vld [vmem:[#allocation9 + $0x48] sm:$0xff]
        %v1035 = vld [vmem:[#allocation9 + $0x50] sm:$0xff]
        %v1036 = vld [vmem:[#allocation9 + $0x58] sm:$0xff]
        %v1037 = vld [vmem:[#allocation9 + $0x60] sm:$0xff]
        %v1038 = vld [vmem:[#allocation9 + $0x68] sm:$0xff]
        %v1039 = vld [vmem:[#allocation9 + $0x70] sm:$0xff]
        %v1040 = vld [vmem:[#allocation9 + $0x78] sm:$0xff]
        %v1041 = vld [vmem:[%s6] sm:$0x1]
        %v1043 = vlaneseq
        %v1044 = vshrl.u32 %v1043, 7
        %v1045 = vsub.s32 0, %v1044
        %v1046 = vrot.slane %v1041, %v1045
        %1048 = vmatprep.subr.mxu0 0.0
        %1049 = vmatpush1.msra.mxu0 %v1025
        %1050 = vmatprep.subr.mxu0 0.0
        %1051 = vmatpush1.msra.mxu0 %v1026
        %1052 = vmatprep.subr.mxu0 0.0
        %1053 = vmatpush1.msra.mxu0 %v1027
        %1054 = vmatprep.subr.mxu0 0.0
        %1055 = vmatpush1.msra.mxu0 %v1028
        %1056 = vmatprep.subr.mxu0 0.0
        %1057 = vmatpush1.msra.mxu0 %v1029
        %1058 = vmatprep.subr.mxu0 0.0
        %1059 = vmatpush1.msra.mxu0 %v1030
        %1060 = vmatprep.subr.mxu0 0.0
        %1061 = vmatpush1.msra.mxu0 %v1031
        %1062 = vmatprep.subr.mxu0 0.0
        %1063 = vmatpush1.msra.mxu0 %v1032
        %1064 = vmatprep.subr.mxu0 0.0
        %1065 = vmatpush1.msra.mxu0 %v1033
        %1066 = vmatprep.subr.mxu0 0.0
        %1067 = vmatpush1.msra.mxu0 %v1034
        %1068 = vmatprep.subr.mxu0 0.0
        %1069 = vmatpush1.msra.mxu0 %v1035
        %1070 = vmatprep.subr.mxu0 0.0
        %1071 = vmatpush1.msra.mxu0 %v1036
        %1072 = vmatprep.subr.mxu0 0.0
        %1073 = vmatpush1.msra.mxu0 %v1037
        %1074 = vmatprep.subr.mxu0 0.0
        %1075 = vmatpush1.msra.mxu0 %v1038
        %1076 = vmatprep.subr.mxu0 0.0
        %1077 = vmatpush1.msra.mxu0 %v1039
        %1078 = vmatprep.subr.mxu0 0.0
        %1079 = vmatpush1.msra.mxu0 %v1040
        %1080 = vmatprep.subr.mxu0 0.0
        %1081 = vmatpush1.msra.mxu0 0.0
        %1082 = vmatprep.subr.mxu0 0.0
        %1083 = vmatpush1.msra.mxu0 0.0
        %1084 = vmatprep.subr.mxu0 0.0
        %1085 = vmatpush1.msra.mxu0 0.0
        %1086 = vmatprep.subr.mxu0 0.0
        %1087 = vmatpush1.msra.mxu0 0.0
        %1088 = vmatprep.subr.mxu0 0.0
        %1089 = vmatpush1.msra.mxu0 0.0
        %1090 = vmatprep.subr.mxu0 0.0
        %1091 = vmatpush1.msra.mxu0 0.0
        %1092 = vmatprep.subr.mxu0 0.0
        %1093 = vmatpush1.msra.mxu0 0.0
        %1094 = vmatprep.subr.mxu0 0.0
        %1095 = vmatpush1.msra.mxu0 0.0
        %1096 = vmatprep.subr.mxu0 0.0
        %1097 = vmatpush1.msra.mxu0 0.0
        %1098 = vmatprep.subr.mxu0 0.0
        %1099 = vmatpush1.msra.mxu0 0.0
        %1100 = vmatprep.subr.mxu0 0.0
        %1101 = vmatpush1.msra.mxu0 0.0
        %1102 = vmatprep.subr.mxu0 0.0
        %1103 = vmatpush1.msra.mxu0 0.0
        %1104 = vmatprep.subr.mxu0 0.0
        %1105 = vmatpush1.msra.mxu0 0.0
        %1106 = vmatprep.subr.mxu0 0.0
        %1107 = vmatpush1.msra.mxu0 0.0
        %1108 = vmatprep.subr.mxu0 0.0
        %1109 = vmatpush1.msra.mxu0 0.0
        %1110 = vmatprep.subr.mxu0 0.0
        %1111 = vmatpush1.msra.mxu0 0.0
        %1112 = vmatprep.mubr.f32.mxu0 0.0
        %1113 = vmatmul.mubr.f32.gmra.mrb[0].mxu0 %v1022
        %v1114 = vpop.f32.mrb[0].mxu0
        %v1115 = vadd.f32 %v1046, %v1114
        %v1116 = vpop.f32.mrb[0].mxu0
        %1117 = vmatprep.mubr.f32.mxu0 0.0
        %1118 = vmatmul.mubr.f32.gmra.mrb[0].mxu0 %v1024
        %v1119 = vpop.f32.mrb[0].mxu0
        %v1120 = vadd.f32 %v1046, %v1119
        %v1121 = vpop.f32.mrb[0].mxu0
        %1122 = vdwg.mxu0
        %v1123 = vadd.f32 %v1019, %v1115
        %v1124 = vadd.f32 %v1020, %v1120
        %v1125 = vmax.f32 %v1123, 0.0
        %v1126 = vmax.f32 %v1124, 0.0
        %1127 = vst [vmem:[%s387] sm:$0xff] %v1125
        %1128 = vst [vmem:[%s387 + $0x8] sm:$0xff] %v1126
        %1129 = vst [vmem:[%s394] sm:$0xff] %v1123
        %1130 = vst [vmem:[%s394 + $0x8] sm:$0xff] %v1124
        %s1131 = sand.u32 %s205, 1
        %s1132 = scalar_lea.sflag [#allocation5], %s1131
        %s1133 = sand.u32 %s205, 1
        %s1134 = smul.addr %s1133, 16
        %s1135 = scalar_lea.vmem [#allocation11], %s1134
        %s1136 = sand.u32 %s233, 1
        %s1137 = scalar_lea.sflag [#allocation13], %s1136
        %s1138 = sand.u32 %s233, 1
        %s1139 = smul.addr %s1138, 16
        %s1140 = scalar_lea.vmem [#allocation12], %s1139
        // Predicated region
        $region69: #{tpu_custom_call.1} parent=47 // pred_check
          %p1141 = pneg %p215
        $region70: #{tpu_custom_call.1} parent=47 // pred_check_branch
          %1143 = sbr.rel (%p1141) target = $region72
        $region71: #{tpu_custom_call.1} parent=47 // pred_region
          %s1144 = smul.u32 2, %s36
          %s1146 = ssub.s32 256, 256
          %1147 = vsyncadd %s1132, %s1146
          %s1148 = smul.addr %s35, 2
          %s1149 = sadd.s32 %s1144, %s1148
          %s1150 = smul.addr %s1149, 128
          %s1151 = scalar_lea.hbm %s7, %s1150
          %s1152 = sshll.u32 %s1135, 4
          %s1153 = int_to_ptr.vmem [resolvable:$true] %s1152
          %1158 = dma.vmem_to_hbm [thread:$0]  %s1153, 256, %s1151, %s1132, 128, 128, 8
        $region72: #{tpu_custom_call.1} parent=47 // pred_fallthru
          _
        // Predicated region
        $region73: #{tpu_custom_call.1} parent=47 // pred_check
          %p1159 = pneg %p243
        $region74: #{tpu_custom_call.1} parent=47 // pred_check_branch
          %1161 = sbr.rel (%p1159) target = $region76
        $region75: #{tpu_custom_call.1} parent=47 // pred_region
          %s1162 = smul.u32 2, %s36
          %s1164 = ssub.s32 256, 256
          %1165 = vsyncadd %s1137, %s1164
          %s1166 = smul.addr %s35, 2
          %s1167 = sadd.s32 %s1162, %s1166
          %s1168 = smul.addr %s1167, 128
          %s1169 = scalar_lea.hbm %s8, %s1168
          %s1170 = sshll.u32 %s1140, 4
          %s1171 = int_to_ptr.vmem [resolvable:$true] %s1170
          %1176 = dma.vmem_to_hbm [thread:$0]  %s1171, 256, %s1169, %s1137, 128, 128, 8
        $region76: #{tpu_custom_call.1} parent=47 // pred_fallthru
          _
      $region48: #{tpu_custom_call.1} parent=5 // pred_fallthru
        _
      %p1177 = scmp.le.s32.totalorder 2, %s26
      // Predicated region
      $region77: #{tpu_custom_call.1} parent=5 // pred_check
        %p1178 = pneg %p1177
      $region78: #{tpu_custom_call.1} parent=5 // pred_check_branch
        %1180 = sbr.rel (%p1178) target = $region80
      $region79: #{tpu_custom_call.1} parent=5 // pred_region
        %s1181 = ssub.s32 %s26, 2
        // Predicated region
        $region81: #{tpu_custom_call.1} parent=79 // pred_check
          %p1182 = pneg %p221
        $region82: #{tpu_custom_call.1} parent=79 // pred_check_branch
          %1184 = sbr.rel (%p1182) target = $region84
        $region83: #{tpu_custom_call.1} parent=79 // pred_region
          %s1185 = sand.u32 %s206, 1
          %s1186 = scalar_lea.sflag [#allocation5], %s1185
          %s1187 = sand.u32 %s206, 1
          %s1188 = smul.addr %s1187, 16
          %s1189 = scalar_lea.vmem [#allocation11], %s1188
          %1190 = dma.done %s1186, 256
        $region84: #{tpu_custom_call.1} parent=79 // pred_fallthru
          _
        // Predicated region
        $region85: #{tpu_custom_call.1} parent=79 // pred_check
          %p1191 = pneg %p249
        $region86: #{tpu_custom_call.1} parent=79 // pred_check_branch
          %1193 = sbr.rel (%p1191) target = $region88
        $region87: #{tpu_custom_call.1} parent=79 // pred_region
          %s1194 = sand.u32 %s234, 1
          %s1195 = scalar_lea.sflag [#allocation13], %s1194
          %s1196 = sand.u32 %s234, 1
          %s1197 = smul.addr %s1196, 16
          %s1198 = scalar_lea.vmem [#allocation12], %s1197
          %1199 = dma.done %s1195, 256
        $region88: #{tpu_custom_call.1} parent=79 // pred_fallthru
          _
      $region80: #{tpu_custom_call.1} parent=5 // pred_fallthru
        _
    $region6: #{tpu_custom_call.1} parent=1 // loop_footer
      %s30 = sadd.s32 1, %s26
    $region7: #{tpu_custom_call.1} parent=1 // loop_footer_branch
      %25 = sbr.rel target = $region3
    $region8: #{tpu_custom_call.1} parent=1 // loop_exit
      _
    %1200 = vsyncpa [#allocation4], 1
    %s1201 = scalar_lea.sflag [#allocation4], 1
    %1202 = vsyncpa %s1201, 1
    %1203 = vsyncpa [#allocation7], 1
    %1204 = vsyncpa [#allocation10], 1
    %1205 = vsyncpa [#allocation5], 1
    %s1206 = scalar_lea.sflag [#allocation5], 1
    %1207 = vsyncpa %s1206, 1
    %1208 = vsyncpa [#allocation13], 1
    %s1209 = scalar_lea.sflag [#allocation13], 1
    %1210 = vsyncpa %s1209, 1

</llo_original>
